<compile_context>
chip_gen: v7x
topology: tpu7x:2x2x1
jax: 0.10.0
libtpu: 0.0.40
codegen_flags: <defaults>
</compile_context>

<pallas_src>
import math
import functools

import jax
import jax.numpy as jnp
from jax.experimental import pallas as pl
from jax.experimental.pallas import tpu as pltpu


def _fused_attention_kernel(x_ref, wf_ref, bf_ref, o_ref, *, head_num, head_dim):
    # x_ref: (Bt, S, D_in) block of batch elements.
    Bt, S, D_in = x_ref.shape
    D_out = head_num * head_dim

    # One fused projection over the flattened (Bt*S, D_in) slab:
    #   qkv = x @ (Wp @ [Wq|Wk|Wv]) + (bp @ [Wq|Wk|Wv] + [bq|bk|bv])
    x2 = x_ref[...].reshape(Bt * S, D_in)
    qkv = jnp.dot(x2, wf_ref[...], preferred_element_type=jnp.float32) + bf_ref[...]
    qkv = qkv.reshape(Bt, S, 3 * D_out)

    q = qkv[:, :, 0:D_out]
    k = qkv[:, :, D_out:2 * D_out]
    v = qkv[:, :, 2 * D_out:3 * D_out]

    scale = 1.0 / math.sqrt(head_dim)

    # Static loop over heads (small); each head is batched over Bt via einsum.
    ctx_heads = []
    for h in range(head_num):
        lo = h * head_dim
        qh = q[:, :, lo:lo + head_dim]                      # (Bt, S, Dh)
        kh = k[:, :, lo:lo + head_dim]                      # (Bt, S, Dh)
        vh = v[:, :, lo:lo + head_dim]                      # (Bt, S, Dh)

        s = jnp.einsum("bqd,bkd->bqk", qh, kh,
                       preferred_element_type=jnp.float32) * scale   # (Bt, S, S)

        # Numerically stable softmax, all in f32.
        m = jnp.max(s, axis=-1, keepdims=True)
        p = jnp.exp(s - m)
        inv = pl.reciprocal(jnp.sum(p, axis=-1, keepdims=True), approx=True)
        attn = p * inv

        ctx_heads.append(jnp.einsum("bqk,bkd->bqd", attn, vh,
                                    preferred_element_type=jnp.float32))

    # Single lane-dense store of the full (Bt, S, D_out) tile.
    o_ref[...] = jnp.concatenate(ctx_heads, axis=-1).astype(o_ref.dtype)


def fuse_params(params):
    """Fold input_proj + Q/K/V linears into one (D_in, 3*D_out) weight/bias."""
    wp, bp, wq, bq, wk, bk, wv, bv = params
    w_qkv = jnp.concatenate([wq, wk, wv], axis=1)           # (D_out, 3*D_out)
    b_qkv = jnp.concatenate([bq, bk, bv], axis=1)           # (1, 3*D_out)
    if wp is None:                                          # nn.Identity case
        return w_qkv, b_qkv
    w_f = wp @ w_qkv                                        # (D_in, 3*D_out)
    b_f = bp @ w_qkv + b_qkv                                # (1, 3*D_out)
    return w_f, b_f


def self_attention_pallas(x, params, *, head_num, head_dim, block_b=None):
    B, S, D_in = x.shape
    D_out = head_num * head_dim

    w_f, b_f = fuse_params(params)
    D_in_eff = w_f.shape[0]
    assert D_in_eff == D_in, "fused weight input dim must match x feature dim"

    # Pick a batch block: largest divisor of B keeping the row slab modest.
    if block_b is None:
        block_b = 1
        for cand in range(B, 0, -1):
            if B % cand == 0 and cand * S <= 1024:
                block_b = cand
                break

    kernel = functools.partial(_fused_attention_kernel,
                               head_num=head_num, head_dim=head_dim)

    return pl.pallas_call(
        kernel,
        out_shape=jax.ShapeDtypeStruct((B, S, D_out), jnp.float32),
        grid_spec=pltpu.PrefetchScalarGridSpec(
            num_scalar_prefetch=0,
            grid=(B // block_b,),
            in_specs=[
                pl.BlockSpec((block_b, S, D_in), lambda i: (i, 0, 0)),  # x
                pl.BlockSpec((D_in, 3 * D_out), lambda i: (0, 0)),      # fused W
                pl.BlockSpec((1, 3 * D_out), lambda i: (0, 0)),         # fused b
            ],
            out_specs=pl.BlockSpec((block_b, S, D_out), lambda i: (i, 0, 0)),
        ),
        compiler_params=pltpu.CompilerParams(
            dimension_semantics=("parallel",)),
    )(x, w_f, b_f)


def self_attention_reference(x, params, *, head_num, head_dim):
    """Pure-JAX reference mirroring the PyTorch forward pass (unfused)."""
    wp, bp, wq, bq, wk, bk, wv, bv = params
    B, S, _ = x.shape
    D_out = head_num * head_dim

    xp = x if wp is None else x @ wp + bp
    q = (xp @ wq + bq).reshape(B, S, head_num, head_dim).transpose(0, 2, 1, 3)
    k = (xp @ wk + bk).reshape(B, S, head_num, head_dim).transpose(0, 2, 1, 3)
    v = (xp @ wv + bv).reshape(B, S, head_num, head_dim).transpose(0, 2, 1, 3)

    scores = jnp.einsum("bhqd,bhkd->bhqk", q, k) / math.sqrt(head_dim)
    attn = jax.nn.softmax(scores, axis=-1)
    ctx = jnp.einsum("bhqk,bhkd->bhqd", attn, v)
    return ctx.transpose(0, 2, 1, 3).reshape(B, S, D_out)


def init_params(key, input_dim, head_num, head_dim):
    """Deterministic synthetic parameters.

    PyTorch nn.Linear stores weight as (out, in) and computes x @ W^T + b.
    We generate (out, in) weights and pass their transpose (in, out) around.
    Identity input_proj is represented as wp=None / bp=None (no eye matmul).
    """
    D_out = head_num * head_dim
    keys = jax.random.split(key, 8)

    def linear(kw, kb, din, dout):
        bound = 1.0 / math.sqrt(din)
        w = jax.random.uniform(kw, (dout, din), jnp.float32, -bound, bound)
        b = jax.random.uniform(kb, (dout,), jnp.float32, -bound, bound)
        return w.T, b.reshape(1, dout)

    if input_dim != D_out:
        wp, bp = linear(keys[0], keys[1], input_dim, D_out)   # input_proj
    else:
        wp, bp = None, None                                   # nn.Identity

    wq, bq = linear(keys[2], keys[3], D_out, D_out)
    wk, bk = linear(keys[4], keys[5], D_out, D_out)
    wv, bv = linear(keys[6], keys[7], D_out, D_out)
    return (wp, bp, wq, bq, wk, bk, wv, bv)


def _check(B, S, head_num, head_dim, input_dim, seed):
    key = jax.random.PRNGKey(seed)
    k_x, k_p = jax.random.split(key)
    x = jax.random.normal(k_x, (B, S, input_dim), jnp.float32)
    params = init_params(k_p, input_dim, head_num, head_dim)

    out = self_attention_pallas(x, params, head_num=head_num, head_dim=head_dim)
    out = jax.block_until_ready(out)

    ref = self_attention_reference(x, params, head_num=head_num, head_dim=head_dim)
    assert out.shape == (B, S, head_num * head_dim)
    # Tolerance accounts for the EUP approximate-reciprocal softmax denominator.
    assert jnp.allclose(out, ref, atol=2e-3, rtol=2e-3), "mismatch vs reference"


if __name__ == "__main__":
    # Small shapes consistent with the module's forward:
    #   batch=2, seq=8, head_num=4, head_dim=8 -> output_dim=32
    B, S = 2, 8
    head_num, head_dim = 4, 8

    # Case 1: input_dim != output_dim -> input_proj folded into fused QKV weight.
    _check(B, S, head_num, head_dim, input_dim=48, seed=0)

    # Case 2: input_dim == output_dim -> identity projection skipped entirely.
    _check(B, S, head_num, head_dim, input_dim=head_num * head_dim, seed=0)

    print("KERNEL_OK")
</pallas_src>

<mosaic_0001>
module attributes {stable_mosaic.version = 11 : i64} {
  func.func @_fused_attention_kernel(%arg0: i32, %arg1: memref<2x8x48xf32, #tpu.memory_space<vmem>>, %arg2: memref<48x96xf32, #tpu.memory_space<vmem>>, %arg3: memref<1x96xf32, #tpu.memory_space<vmem>>, %arg4: memref<2x8x32xf32, #tpu.memory_space<vmem>>) attributes {dimension_semantics = [#tpu.dimension_semantics<parallel>], iteration_bounds = array<i64: 1>, scalar_prefetch = 0 : i64, scratch_operands = 0 : i64, tpu.core_type = #tpu.core_type<tc>, window_params = [{transform_indices = @transform_0, window_bounds = array<i64: 2, 8, 48>}, {pipeline_mode = #tpu.pipeline_mode<synchronous>, transform_indices = @transform_1, window_bounds = array<i64: 48, 96>}, {pipeline_mode = #tpu.pipeline_mode<synchronous>, transform_indices = @transform_2, window_bounds = array<i64: 1, 96>}, {transform_indices = @transform_3, window_bounds = array<i64: 2, 8, 32>}]} {
    %c0 = arith.constant 0 : index
    %c0_0 = arith.constant 0 : index
    %c0_1 = arith.constant 0 : index
    %0 = vector.load %arg1[%c0, %c0_0, %c0_1] : memref<2x8x48xf32, #tpu.memory_space<vmem>>, vector<2x8x48xf32>
    %1 = vector.shape_cast %0 : vector<2x8x48xf32> to vector<16x48xf32>
    %c0_2 = arith.constant 0 : index
    %c0_3 = arith.constant 0 : index
    %2 = vector.load %arg2[%c0_2, %c0_3] : memref<48x96xf32, #tpu.memory_space<vmem>>, vector<48x96xf32>
    %cst = arith.constant dense<0.000000e+00> : vector<16x96xf32>
    %3 = tpu.matmul %1, %2, %cst {dimension_numbers = #tpu.dot_dimension_numbers<[1], [0], [0], [1], [0, 0, 1, 1], [], []>} : vector<16x48xf32>, vector<48x96xf32>, vector<16x96xf32> -> vector<16x96xf32>
    %c0_4 = arith.constant 0 : index
    %c0_5 = arith.constant 0 : index
    %4 = vector.load %arg3[%c0_4, %c0_5] : memref<1x96xf32, #tpu.memory_space<vmem>>, vector<1x96xf32>
    %5 = vector.broadcast %4 : vector<1x96xf32> to vector<16x96xf32>
    %6 = arith.addf %3, %5 : vector<16x96xf32>
    %7 = vector.shape_cast %6 : vector<16x96xf32> to vector<2x8x96xf32>
    %8 = vector.extract_strided_slice %7 {offsets = [0, 0, 0], sizes = [2, 8, 32], strides = [1, 1, 1]} : vector<2x8x96xf32> to vector<2x8x32xf32>
    %9 = vector.extract_strided_slice %7 {offsets = [0, 0, 32], sizes = [2, 8, 32], strides = [1, 1, 1]} : vector<2x8x96xf32> to vector<2x8x32xf32>
    %10 = vector.extract_strided_slice %7 {offsets = [0, 0, 64], sizes = [2, 8, 32], strides = [1, 1, 1]} : vector<2x8x96xf32> to vector<2x8x32xf32>
    %11 = vector.extract_strided_slice %8 {offsets = [0, 0, 0], sizes = [2, 8, 8], strides = [1, 1, 1]} : vector<2x8x32xf32> to vector<2x8x8xf32>
    %12 = vector.extract_strided_slice %9 {offsets = [0, 0, 0], sizes = [2, 8, 8], strides = [1, 1, 1]} : vector<2x8x32xf32> to vector<2x8x8xf32>
    %13 = vector.extract_strided_slice %10 {offsets = [0, 0, 0], sizes = [2, 8, 8], strides = [1, 1, 1]} : vector<2x8x32xf32> to vector<2x8x8xf32>
    "tpu.trace_start"() <{level = 10 : i32, message = "bqd,bkd->bqk"}> : () -> ()
    %cst_6 = arith.constant dense<0.000000e+00> : vector<2x8x8xf32>
    %14 = tpu.matmul %11, %12, %cst_6 {dimension_numbers = #tpu.dot_dimension_numbers<[2], [2], [1], [1], [0, 0, 0, 1, 1, 1], [0], [0]>} : vector<2x8x8xf32>, vector<2x8x8xf32>, vector<2x8x8xf32> -> vector<2x8x8xf32>
    "tpu.trace_stop"() : () -> ()
    %cst_7 = arith.constant 0.353553385 : f32
    %15 = vector.broadcast %cst_7 : f32 to vector<2x8x8xf32>
    %16 = arith.mulf %14, %15 : vector<2x8x8xf32>
    %cst_8 = arith.constant dense<0xFF800000> : vector<2x8xf32>
    %17 = vector.multi_reduction <maximumf>, %16, %cst_8 [2] : vector<2x8x8xf32> to vector<2x8xf32>
    %18 = vector.shape_cast %17 : vector<2x8xf32> to vector<2x8x1xf32>
    %19 = vector.broadcast %18 : vector<2x8x1xf32> to vector<2x8x8xf32>
    %20 = arith.subf %16, %19 : vector<2x8x8xf32>
    %21 = math.exp %20 : vector<2x8x8xf32>
    %cst_9 = arith.constant dense<0.000000e+00> : vector<2x8xf32>
    %22 = vector.multi_reduction <add>, %21, %cst_9 [2] : vector<2x8x8xf32> to vector<2x8xf32>
    %23 = vector.shape_cast %22 : vector<2x8xf32> to vector<2x8x1xf32>
    %24 = tpu.reciprocal %23 {approx = true} : vector<2x8x1xf32> -> vector<2x8x1xf32>
    %25 = vector.broadcast %24 : vector<2x8x1xf32> to vector<2x8x8xf32>
    %26 = arith.mulf %21, %25 : vector<2x8x8xf32>
    "tpu.trace_start"() <{level = 10 : i32, message = "bqk,bkd->bqd"}> : () -> ()
    %cst_10 = arith.constant dense<0.000000e+00> : vector<2x8x8xf32>
    %27 = tpu.matmul %26, %13, %cst_10 {dimension_numbers = #tpu.dot_dimension_numbers<[2], [1], [1], [2], [0, 0, 0, 1, 1, 2], [0], [0]>} : vector<2x8x8xf32>, vector<2x8x8xf32>, vector<2x8x8xf32> -> vector<2x8x8xf32>
    "tpu.trace_stop"() : () -> ()
    %28 = vector.extract_strided_slice %8 {offsets = [0, 0, 8], sizes = [2, 8, 8], strides = [1, 1, 1]} : vector<2x8x32xf32> to vector<2x8x8xf32>
    %29 = vector.extract_strided_slice %9 {offsets = [0, 0, 8], sizes = [2, 8, 8], strides = [1, 1, 1]} : vector<2x8x32xf32> to vector<2x8x8xf32>
    %30 = vector.extract_strided_slice %10 {offsets = [0, 0, 8], sizes = [2, 8, 8], strides = [1, 1, 1]} : vector<2x8x32xf32> to vector<2x8x8xf32>
    "tpu.trace_start"() <{level = 10 : i32, message = "bqd,bkd->bqk"}> : () -> ()
    %cst_11 = arith.constant dense<0.000000e+00> : vector<2x8x8xf32>
    %31 = tpu.matmul %28, %29, %cst_11 {dimension_numbers = #tpu.dot_dimension_numbers<[2], [2], [1], [1], [0, 0, 0, 1, 1, 1], [0], [0]>} : vector<2x8x8xf32>, vector<2x8x8xf32>, vector<2x8x8xf32> -> vector<2x8x8xf32>
    "tpu.trace_stop"() : () -> ()
    %cst_12 = arith.constant 0.353553385 : f32
    %32 = vector.broadcast %cst_12 : f32 to vector<2x8x8xf32>
    %33 = arith.mulf %31, %32 : vector<2x8x8xf32>
    %cst_13 = arith.constant dense<0xFF800000> : vector<2x8xf32>
    %34 = vector.multi_reduction <maximumf>, %33, %cst_13 [2] : vector<2x8x8xf32> to vector<2x8xf32>
    %35 = vector.shape_cast %34 : vector<2x8xf32> to vector<2x8x1xf32>
    %36 = vector.broadcast %35 : vector<2x8x1xf32> to vector<2x8x8xf32>
    %37 = arith.subf %33, %36 : vector<2x8x8xf32>
    %38 = math.exp %37 : vector<2x8x8xf32>
    %cst_14 = arith.constant dense<0.000000e+00> : vector<2x8xf32>
    %39 = vector.multi_reduction <add>, %38, %cst_14 [2] : vector<2x8x8xf32> to vector<2x8xf32>
    %40 = vector.shape_cast %39 : vector<2x8xf32> to vector<2x8x1xf32>
    %41 = tpu.reciprocal %40 {approx = true} : vector<2x8x1xf32> -> vector<2x8x1xf32>
    %42 = vector.broadcast %41 : vector<2x8x1xf32> to vector<2x8x8xf32>
    %43 = arith.mulf %38, %42 : vector<2x8x8xf32>
    "tpu.trace_start"() <{level = 10 : i32, message = "bqk,bkd->bqd"}> : () -> ()
    %cst_15 = arith.constant dense<0.000000e+00> : vector<2x8x8xf32>
    %44 = tpu.matmul %43, %30, %cst_15 {dimension_numbers = #tpu.dot_dimension_numbers<[2], [1], [1], [2], [0, 0, 0, 1, 1, 2], [0], [0]>} : vector<2x8x8xf32>, vector<2x8x8xf32>, vector<2x8x8xf32> -> vector<2x8x8xf32>
    "tpu.trace_stop"() : () -> ()
    %45 = vector.extract_strided_slice %8 {offsets = [0, 0, 16], sizes = [2, 8, 8], strides = [1, 1, 1]} : vector<2x8x32xf32> to vector<2x8x8xf32>
    %46 = vector.extract_strided_slice %9 {offsets = [0, 0, 16], sizes = [2, 8, 8], strides = [1, 1, 1]} : vector<2x8x32xf32> to vector<2x8x8xf32>
    %47 = vector.extract_strided_slice %10 {offsets = [0, 0, 16], sizes = [2, 8, 8], strides = [1, 1, 1]} : vector<2x8x32xf32> to vector<2x8x8xf32>
    "tpu.trace_start"() <{level = 10 : i32, message = "bqd,bkd->bqk"}> : () -> ()
    %cst_16 = arith.constant dense<0.000000e+00> : vector<2x8x8xf32>
    %48 = tpu.matmul %45, %46, %cst_16 {dimension_numbers = #tpu.dot_dimension_numbers<[2], [2], [1], [1], [0, 0, 0, 1, 1, 1], [0], [0]>} : vector<2x8x8xf32>, vector<2x8x8xf32>, vector<2x8x8xf32> -> vector<2x8x8xf32>
    "tpu.trace_stop"() : () -> ()
    %cst_17 = arith.constant 0.353553385 : f32
    %49 = vector.broadcast %cst_17 : f32 to vector<2x8x8xf32>
    %50 = arith.mulf %48, %49 : vector<2x8x8xf32>
    %cst_18 = arith.constant dense<0xFF800000> : vector<2x8xf32>
    %51 = vector.multi_reduction <maximumf>, %50, %cst_18 [2] : vector<2x8x8xf32> to vector<2x8xf32>
    %52 = vector.shape_cast %51 : vector<2x8xf32> to vector<2x8x1xf32>
    %53 = vector.broadcast %52 : vector<2x8x1xf32> to vector<2x8x8xf32>
    %54 = arith.subf %50, %53 : vector<2x8x8xf32>
    %55 = math.exp %54 : vector<2x8x8xf32>
    %cst_19 = arith.constant dense<0.000000e+00> : vector<2x8xf32>
    %56 = vector.multi_reduction <add>, %55, %cst_19 [2] : vector<2x8x8xf32> to vector<2x8xf32>
    %57 = vector.shape_cast %56 : vector<2x8xf32> to vector<2x8x1xf32>
    %58 = tpu.reciprocal %57 {approx = true} : vector<2x8x1xf32> -> vector<2x8x1xf32>
    %59 = vector.broadcast %58 : vector<2x8x1xf32> to vector<2x8x8xf32>
    %60 = arith.mulf %55, %59 : vector<2x8x8xf32>
    "tpu.trace_start"() <{level = 10 : i32, message = "bqk,bkd->bqd"}> : () -> ()
    %cst_20 = arith.constant dense<0.000000e+00> : vector<2x8x8xf32>
    %61 = tpu.matmul %60, %47, %cst_20 {dimension_numbers = #tpu.dot_dimension_numbers<[2], [1], [1], [2], [0, 0, 0, 1, 1, 2], [0], [0]>} : vector<2x8x8xf32>, vector<2x8x8xf32>, vector<2x8x8xf32> -> vector<2x8x8xf32>
    "tpu.trace_stop"() : () -> ()
    %62 = vector.extract_strided_slice %8 {offsets = [0, 0, 24], sizes = [2, 8, 8], strides = [1, 1, 1]} : vector<2x8x32xf32> to vector<2x8x8xf32>
    %63 = vector.extract_strided_slice %9 {offsets = [0, 0, 24], sizes = [2, 8, 8], strides = [1, 1, 1]} : vector<2x8x32xf32> to vector<2x8x8xf32>
    %64 = vector.extract_strided_slice %10 {offsets = [0, 0, 24], sizes = [2, 8, 8], strides = [1, 1, 1]} : vector<2x8x32xf32> to vector<2x8x8xf32>
    "tpu.trace_start"() <{level = 10 : i32, message = "bqd,bkd->bqk"}> : () -> ()
    %cst_21 = arith.constant dense<0.000000e+00> : vector<2x8x8xf32>
    %65 = tpu.matmul %62, %63, %cst_21 {dimension_numbers = #tpu.dot_dimension_numbers<[2], [2], [1], [1], [0, 0, 0, 1, 1, 1], [0], [0]>} : vector<2x8x8xf32>, vector<2x8x8xf32>, vector<2x8x8xf32> -> vector<2x8x8xf32>
    "tpu.trace_stop"() : () -> ()
    %cst_22 = arith.constant 0.353553385 : f32
    %66 = vector.broadcast %cst_22 : f32 to vector<2x8x8xf32>
    %67 = arith.mulf %65, %66 : vector<2x8x8xf32>
    %cst_23 = arith.constant dense<0xFF800000> : vector<2x8xf32>
    %68 = vector.multi_reduction <maximumf>, %67, %cst_23 [2] : vector<2x8x8xf32> to vector<2x8xf32>
    %69 = vector.shape_cast %68 : vector<2x8xf32> to vector<2x8x1xf32>
    %70 = vector.broadcast %69 : vector<2x8x1xf32> to vector<2x8x8xf32>
    %71 = arith.subf %67, %70 : vector<2x8x8xf32>
    %72 = math.exp %71 : vector<2x8x8xf32>
    %cst_24 = arith.constant dense<0.000000e+00> : vector<2x8xf32>
    %73 = vector.multi_reduction <add>, %72, %cst_24 [2] : vector<2x8x8xf32> to vector<2x8xf32>
    %74 = vector.shape_cast %73 : vector<2x8xf32> to vector<2x8x1xf32>
    %75 = tpu.reciprocal %74 {approx = true} : vector<2x8x1xf32> -> vector<2x8x1xf32>
    %76 = vector.broadcast %75 : vector<2x8x1xf32> to vector<2x8x8xf32>
    %77 = arith.mulf %72, %76 : vector<2x8x8xf32>
    "tpu.trace_start"() <{level = 10 : i32, message = "bqk,bkd->bqd"}> : () -> ()
    %cst_25 = arith.constant dense<0.000000e+00> : vector<2x8x8xf32>
    %78 = tpu.matmul %77, %64, %cst_25 {dimension_numbers = #tpu.dot_dimension_numbers<[2], [1], [1], [2], [0, 0, 0, 1, 1, 2], [0], [0]>} : vector<2x8x8xf32>, vector<2x8x8xf32>, vector<2x8x8xf32> -> vector<2x8x8xf32>
    "tpu.trace_stop"() : () -> ()
    %79 = tpu.concatenate %27, %44, %61, %78 in 2 : vector<2x8x8xf32>, vector<2x8x8xf32>, vector<2x8x8xf32>, vector<2x8x8xf32> -> vector<2x8x32xf32>
    %c0_26 = arith.constant 0 : index
    %c0_27 = arith.constant 0 : index
    %c0_28 = arith.constant 0 : index
    %80 = vector.load %arg4[%c0_26, %c0_27, %c0_28] : memref<2x8x32xf32, #tpu.memory_space<vmem>>, vector<2x8x32xf32>
    tpu.vector_store %arg4[%c0_26, %c0_27, %c0_28], %79 {strides = array<i32>} : memref<2x8x32xf32, #tpu.memory_space<vmem>>, vector<2x8x32xf32>,
    return
  }
  func.func @transform_0(%arg0: i32) -> (i32, i32, i32) {
    %c0_i32 = arith.constant 0 : i32
    %c0_i32_0 = arith.constant 0 : i32
    %c0_i32_1 = arith.constant 0 : i32
    return %arg0, %c0_i32, %c0_i32_0 : i32, i32, i32
  }
  func.func @transform_1(%arg0: i32) -> (i32, i32) {
    %c0_i32 = arith.constant 0 : i32
    %c0_i32_0 = arith.constant 0 : i32
    %c0_i32_1 = arith.constant 0 : i32
    return %c0_i32, %c0_i32_0 : i32, i32
  }
  func.func @transform_2(%arg0: i32) -> (i32, i32) {
    %c0_i32 = arith.constant 0 : i32
    %c0_i32_0 = arith.constant 0 : i32
    %c0_i32_1 = arith.constant 0 : i32
    return %c0_i32, %c0_i32_0 : i32, i32
  }
  func.func @transform_3(%arg0: i32) -> (i32, i32, i32) {
    %c0_i32 = arith.constant 0 : i32
    %c0_i32_0 = arith.constant 0 : i32
    %c0_i32_1 = arith.constant 0 : i32
    return %arg0, %c0_i32, %c0_i32_0 : i32, i32, i32
  }
}

</mosaic_0001>

<llo_original>
// kernel: tpu_custom_call.1
$region0: #{tpu_custom_call.1}
  #allocation0 [shape = 'u32[]', space=smem, size = 0x4, offset = 0x4, fixed_abs, tag = 'smem constant byte address 0x4 - core index']
  #allocation1 [shape = 'u32[144,128]{1,0:T(1,128)}', space=vmem, size = 0x12000, scoped, tag = 'internal scratch']
  %s0 = inlined_call_operand.hbm [shape: f32[2,8,48], index: 0, kind: input, shape index: {}]
  %s1 = inlined_call_operand.hbm [shape: f32[48,96], index: 1, kind: input, shape index: {}]
  %s2 = inlined_call_operand.vmem [shape: f32[1,96], index: 2, kind: input, shape index: {}]
  %s3 = inlined_call_operand.hbm [shape: f32[2,8,32], index: 3, kind: output, shape index: {}]
  %s4 = sld [smem:[#allocation0]]
  $region30: #{tpu_custom_call.1} parent=0
    _
  %s6 = ssub.s32 1, %s4
  %s7 = scalar_select 0, %s6, %s4
  $region1: #{tpu_custom_call.1} parent=0
    #allocation2 [shape = 'u8[8192]{0}', space=vmem, size = 0x2000, scoped, tag = 'input window, operand 0, single buffered']
    #allocation3 [shape = 's32[1]{0}', space=sflag, size = 0x4, scoped, tag = 'scoped memory for tpu_custom_call.1']
    #allocation4 [shape = 's32[1]{0}', space=sflag, size = 0x4, scoped, tag = 'scoped memory for tpu_custom_call.1']
    #allocation5 [shape = 'u8[24576]{0}', space=vmem, size = 0x6000, scoped, tag = 'input window, operand 1, single buffered']
    #allocation6 [shape = 's32[1]{0}', space=sflag, size = 0x4, scoped, tag = 'scoped memory for tpu_custom_call.1']
    #allocation7 [shape = 'u8[8192]{0}', space=vmem, size = 0x2000, scoped, tag = 'output window, operand 0, single buffered']
    %8 = vsyncpa [#allocation3], 0
    %9 = vsyncpa [#allocation6], 0
    %10 = vsyncpa [#allocation4], 0
    // Predicated region
    $region2: #{tpu_custom_call.1} parent=1 // pred_check
      _
    $region3: #{tpu_custom_call.1} parent=1 // pred_check_branch
      %12 = sbr.rel (0) target = $region5
    $region4: #{tpu_custom_call.1} parent=1 // pred_region
      %s14 = ssub.s32 256, 256
      %15 = vsyncadd [#allocation3], %s14
      %s16 = sshll.u32 [#allocation2], 4
      %s17 = int_to_ptr.vmem [resolvable:$true] %s16
      %22 = dma.hbm_to_vmem [thread:$0]  %s0, 256, %s17, [#allocation3], 128, 128, 8
    $region5: #{tpu_custom_call.1} parent=1 // pred_fallthru
      _
    // Predicated region
    $region6: #{tpu_custom_call.1} parent=1 // pred_check
      _
    $region7: #{tpu_custom_call.1} parent=1 // pred_check_branch
      %24 = sbr.rel (0) target = $region9
    $region8: #{tpu_custom_call.1} parent=1 // pred_region
      %s26 = ssub.s32 768, 768
      %27 = vsyncadd [#allocation6], %s26
      %s28 = sshll.u32 [#allocation5], 4
      %s29 = int_to_ptr.vmem [resolvable:$true] %s28
      %34 = dma.hbm_to_vmem [thread:$0]  %s1, 768, %s29, [#allocation6], 128, 128, 8
    $region9: #{tpu_custom_call.1} parent=1 // pred_fallthru
      _
    // Predicated region
    $region10: #{tpu_custom_call.1} parent=1 // pred_check
      _
    $region11: #{tpu_custom_call.1} parent=1 // pred_check_branch
      %36 = sbr.rel (0) target = $region13
    $region12: #{tpu_custom_call.1} parent=1 // pred_region
      _
    $region13: #{tpu_custom_call.1} parent=1 // pred_fallthru
      _
    // Predicated region
    $region14: #{tpu_custom_call.1} parent=1 // pred_check
      _
    $region15: #{tpu_custom_call.1} parent=1 // pred_check_branch
      %38 = sbr.rel (0) target = $region17
    $region16: #{tpu_custom_call.1} parent=1 // pred_region
      %39 = dma.done [#allocation3], 256
    $region17: #{tpu_custom_call.1} parent=1 // pred_fallthru
      _
    // Predicated region
    $region18: #{tpu_custom_call.1} parent=1 // pred_check
      _
    $region19: #{tpu_custom_call.1} parent=1 // pred_check_branch
      %41 = sbr.rel (0) target = $region21
    $region20: #{tpu_custom_call.1} parent=1 // pred_region
      %42 = dma.done [#allocation6], 768
    $region21: #{tpu_custom_call.1} parent=1 // pred_fallthru
      _
    %v43 = vld [vmem:[#allocation2] sm:$0xff]
    %v44 = vld [vmem:[#allocation2 + $0x8] sm:$0xff]
    %v45 = vld [vmem:[#allocation5] sm:$0xff]
    %v46 = vld [vmem:[#allocation5 + $0x8] sm:$0xff]
    %v47 = vld [vmem:[#allocation5 + $0x10] sm:$0xff]
    %v48 = vld [vmem:[#allocation5 + $0x18] sm:$0xff]
    %v49 = vld [vmem:[#allocation5 + $0x20] sm:$0xff]
    %v50 = vld [vmem:[#allocation5 + $0x28] sm:$0xff]
    %v51 = vld [vmem:[%s2] sm:$0x1]
    %v53 = vlaneseq
    %v54 = vshrl.u32 %v53, 7
    %v55 = vsub.s32 0, %v54
    %v56 = vrot.slane %v51, %v55
    %vm58 = vcmask 392192
    %v60 = vsel %vm58, %v43, 0
    %v63 = vsel %vm58, %v44, 0
    %65 = vmatprep.subr.mxu0 0.0
    %66 = vmatpush1.msra.mxu0 %v45
    %67 = vmatprep.subr.mxu0 0.0
    %68 = vmatpush1.msra.mxu0 %v46
    %69 = vmatprep.subr.mxu0 0.0
    %70 = vmatpush1.msra.mxu0 %v47
    %71 = vmatprep.subr.mxu0 0.0
    %72 = vmatpush1.msra.mxu0 %v48
    %73 = vmatprep.subr.mxu0 0.0
    %74 = vmatpush1.msra.mxu0 %v49
    %75 = vmatprep.subr.mxu0 0.0
    %76 = vmatpush1.msra.mxu0 %v50
    %77 = vmatprep.subr.mxu0 0.0
    %78 = vmatpush1.msra.mxu0 0.0
    %79 = vmatprep.subr.mxu0 0.0
    %80 = vmatpush1.msra.mxu0 0.0
    %81 = vmatprep.subr.mxu0 0.0
    %82 = vmatpush1.msra.mxu0 0.0
    %83 = vmatprep.subr.mxu0 0.0
    %84 = vmatpush1.msra.mxu0 0.0
    %85 = vmatprep.subr.mxu0 0.0
    %86 = vmatpush1.msra.mxu0 0.0
    %87 = vmatprep.subr.mxu0 0.0
    %88 = vmatpush1.msra.mxu0 0.0
    %89 = vmatprep.subr.mxu0 0.0
    %90 = vmatpush1.msra.mxu0 0.0
    %91 = vmatprep.subr.mxu0 0.0
    %92 = vmatpush1.msra.mxu0 0.0
    %93 = vmatprep.subr.mxu0 0.0
    %94 = vmatpush1.msra.mxu0 0.0
    %95 = vmatprep.subr.mxu0 0.0
    %96 = vmatpush1.msra.mxu0 0.0
    %97 = vmatprep.subr.mxu0 0.0
    %98 = vmatpush1.msra.mxu0 0.0
    %99 = vmatprep.subr.mxu0 0.0
    %100 = vmatpush1.msra.mxu0 0.0
    %101 = vmatprep.subr.mxu0 0.0
    %102 = vmatpush1.msra.mxu0 0.0
    %103 = vmatprep.subr.mxu0 0.0
    %104 = vmatpush1.msra.mxu0 0.0
    %105 = vmatprep.subr.mxu0 0.0
    %106 = vmatpush1.msra.mxu0 0.0
    %107 = vmatprep.subr.mxu0 0.0
    %108 = vmatpush1.msra.mxu0 0.0
    %109 = vmatprep.subr.mxu0 0.0
    %110 = vmatpush1.msra.mxu0 0.0
    %111 = vmatprep.subr.mxu0 0.0
    %112 = vmatpush1.msra.mxu0 0.0
    %113 = vmatprep.subr.mxu0 0.0
    %114 = vmatpush1.msra.mxu0 0.0
    %115 = vmatprep.subr.mxu0 0.0
    %116 = vmatpush1.msra.mxu0 0.0
    %117 = vmatprep.subr.mxu0 0.0
    %118 = vmatpush1.msra.mxu0 0.0
    %119 = vmatprep.subr.mxu0 0.0
    %120 = vmatpush1.msra.mxu0 0.0
    %121 = vmatprep.subr.mxu0 0.0
    %122 = vmatpush1.msra.mxu0 0.0
    %123 = vmatprep.subr.mxu0 0.0
    %124 = vmatpush1.msra.mxu0 0.0
    %125 = vmatprep.subr.mxu0 0.0
    %126 = vmatpush1.msra.mxu0 0.0
    %127 = vmatprep.subr.mxu0 0.0
    %128 = vmatpush1.msra.mxu0 0.0
    %129 = vmatprep.mubr.f32.mxu0 0.0
    %130 = vmatmul.mubr.f32.gmra.mrb[0].mxu0 %v60
    %v131 = vpop.f32.mrb[0].mxu0
    %v132 = vadd.f32 %v56, %v131
    %v133 = vpop.f32.mrb[0].mxu0
    %134 = vmatprep.mubr.f32.mxu0 0.0
    %135 = vmatmul.mubr.f32.gmra.mrb[0].mxu0 %v63
    %v136 = vpop.f32.mrb[0].mxu0
    %v137 = vadd.f32 %v56, %v136
    %v138 = vpop.f32.mrb[0].mxu0
    %139 = vdwg.mxu0
    %141 = vrot.lane.b32.xlu0 %v132, 96
    %v142 = vpop.permute.xlu0 %141
    %vm143 = vcmask 64512
    %v144 = vsel %vm143, %v132, 0
    %v146 = vsel %vm143, %v142, 0
    %148 = vmatprep.subr.mxu0 0.0
    %149 = vmatpush1.xpose.msra.mxu0 %v146
    %150 = vmatprep.subr.mxu0 0.0
    %151 = vmatpush1.xpose.msra.mxu0 0.0
    %152 = vmatprep.subr.mxu0 0.0
    %153 = vmatpush1.xpose.msra.mxu0 0.0
    %154 = vmatprep.subr.mxu0 0.0
    %155 = vmatpush1.xpose.msra.mxu0 0.0
    %156 = vmatprep.subr.mxu0 0.0
    %157 = vmatpush1.xpose.msra.mxu0 0.0
    %158 = vmatprep.subr.mxu0 0.0
    %159 = vmatpush1.xpose.msra.mxu0 0.0
    %160 = vmatprep.subr.mxu0 0.0
    %161 = vmatpush1.xpose.msra.mxu0 0.0
    %162 = vmatprep.subr.mxu0 0.0
    %163 = vmatpush1.xpose.msra.mxu0 0.0
    %164 = vmatprep.subr.mxu0 0.0
    %165 = vmatpush1.xpose.msra.mxu0 0.0
    %166 = vmatprep.subr.mxu0 0.0
    %167 = vmatpush1.xpose.msra.mxu0 0.0
    %168 = vmatprep.subr.mxu0 0.0
    %169 = vmatpush1.xpose.msra.mxu0 0.0
    %170 = vmatprep.subr.mxu0 0.0
    %171 = vmatpush1.xpose.msra.mxu0 0.0
    %172 = vmatprep.subr.mxu0 0.0
    %173 = vmatpush1.xpose.msra.mxu0 0.0
    %174 = vmatprep.subr.mxu0 0.0
    %175 = vmatpush1.xpose.msra.mxu0 0.0
    %176 = vmatprep.subr.mxu0 0.0
    %177 = vmatpush1.xpose.msra.mxu0 0.0
    %178 = vmatprep.subr.mxu0 0.0
    %179 = vmatpush1.xpose.msra.mxu0 0.0
    %180 = vmatprep.subr.mxu0 0.0
    %181 = vmatpush1.xpose.msra.mxu0 0.0
    %182 = vmatprep.subr.mxu0 0.0
    %183 = vmatpush1.xpose.msra.mxu0 0.0
    %184 = vmatprep.subr.mxu0 0.0
    %185 = vmatpush1.xpose.msra.mxu0 0.0
    %186 = vmatprep.subr.mxu0 0.0
    %187 = vmatpush1.xpose.msra.mxu0 0.0
    %188 = vmatprep.subr.mxu0 0.0
    %189 = vmatpush1.xpose.msra.mxu0 0.0
    %190 = vmatprep.subr.mxu0 0.0
    %191 = vmatpush1.xpose.msra.mxu0 0.0
    %192 = vmatprep.subr.mxu0 0.0
    %193 = vmatpush1.xpose.msra.mxu0 0.0
    %194 = vmatprep.subr.mxu0 0.0
    %195 = vmatpush1.xpose.msra.mxu0 0.0
    %196 = vmatprep.subr.mxu0 0.0
    %197 = vmatpush1.xpose.msra.mxu0 0.0
    %198 = vmatprep.subr.mxu0 0.0
    %199 = vmatpush1.xpose.msra.mxu0 0.0
    %200 = vmatprep.subr.mxu0 0.0
    %201 = vmatpush1.xpose.msra.mxu0 0.0
    %202 = vmatprep.subr.mxu0 0.0
    %203 = vmatpush1.xpose.msra.mxu0 0.0
    %204 = vmatprep.subr.mxu0 0.0
    %205 = vmatpush1.xpose.msra.mxu0 0.0
    %206 = vmatprep.subr.mxu0 0.0
    %207 = vmatpush1.xpose.msra.mxu0 0.0
    %208 = vmatprep.subr.mxu0 0.0
    %209 = vmatpush1.xpose.msra.mxu0 0.0
    %210 = vmatprep.subr.mxu0 0.0
    %211 = vmatpush1.xpose.msra.mxu0 0.0
    %212 = vmatprep.mubr.f32.mxu0 0.0
    %213 = vmatmul.mubr.f32.gmra.mrb[0].mxu0 %v144
    %v214 = vpop.f32.mrb[0].mxu0
    %v215 = vadd.f32 0.0, %v214
    %v216 = vpop.f32.mrb[0].mxu0
    %217 = vdwg.mxu0
    %219 = vrot.lane.b32.xlu0 %v137, 96
    %v220 = vpop.permute.xlu0 %219
    %v221 = vsel %vm143, %v137, 0
    %v223 = vsel %vm143, %v220, 0
    %225 = vmatprep.subr.mxu0 0.0
    %226 = vmatpush1.xpose.msra.mxu0 %v223
    %227 = vmatprep.subr.mxu0 0.0
    %228 = vmatpush1.xpose.msra.mxu0 0.0
    %229 = vmatprep.subr.mxu0 0.0
    %230 = vmatpush1.xpose.msra.mxu0 0.0
    %231 = vmatprep.subr.mxu0 0.0
    %232 = vmatpush1.xpose.msra.mxu0 0.0
    %233 = vmatprep.subr.mxu0 0.0
    %234 = vmatpush1.xpose.msra.mxu0 0.0
    %235 = vmatprep.subr.mxu0 0.0
    %236 = vmatpush1.xpose.msra.mxu0 0.0
    %237 = vmatprep.subr.mxu0 0.0
    %238 = vmatpush1.xpose.msra.mxu0 0.0
    %239 = vmatprep.subr.mxu0 0.0
    %240 = vmatpush1.xpose.msra.mxu0 0.0
    %241 = vmatprep.subr.mxu0 0.0
    %242 = vmatpush1.xpose.msra.mxu0 0.0
    %243 = vmatprep.subr.mxu0 0.0
    %244 = vmatpush1.xpose.msra.mxu0 0.0
    %245 = vmatprep.subr.mxu0 0.0
    %246 = vmatpush1.xpose.msra.mxu0 0.0
    %247 = vmatprep.subr.mxu0 0.0
    %248 = vmatpush1.xpose.msra.mxu0 0.0
    %249 = vmatprep.subr.mxu0 0.0
    %250 = vmatpush1.xpose.msra.mxu0 0.0
    %251 = vmatprep.subr.mxu0 0.0
    %252 = vmatpush1.xpose.msra.mxu0 0.0
    %253 = vmatprep.subr.mxu0 0.0
    %254 = vmatpush1.xpose.msra.mxu0 0.0
    %255 = vmatprep.subr.mxu0 0.0
    %256 = vmatpush1.xpose.msra.mxu0 0.0
    %257 = vmatprep.subr.mxu0 0.0
    %258 = vmatpush1.xpose.msra.mxu0 0.0
    %259 = vmatprep.subr.mxu0 0.0
    %260 = vmatpush1.xpose.msra.mxu0 0.0
    %261 = vmatprep.subr.mxu0 0.0
    %262 = vmatpush1.xpose.msra.mxu0 0.0
    %263 = vmatprep.subr.mxu0 0.0
    %264 = vmatpush1.xpose.msra.mxu0 0.0
    %265 = vmatprep.subr.mxu0 0.0
    %266 = vmatpush1.xpose.msra.mxu0 0.0
    %267 = vmatprep.subr.mxu0 0.0
    %268 = vmatpush1.xpose.msra.mxu0 0.0
    %269 = vmatprep.subr.mxu0 0.0
    %270 = vmatpush1.xpose.msra.mxu0 0.0
    %271 = vmatprep.subr.mxu0 0.0
    %272 = vmatpush1.xpose.msra.mxu0 0.0
    %273 = vmatprep.subr.mxu0 0.0
    %274 = vmatpush1.xpose.msra.mxu0 0.0
    %275 = vmatprep.subr.mxu0 0.0
    %276 = vmatpush1.xpose.msra.mxu0 0.0
    %277 = vmatprep.subr.mxu0 0.0
    %278 = vmatpush1.xpose.msra.mxu0 0.0
    %279 = vmatprep.subr.mxu0 0.0
    %280 = vmatpush1.xpose.msra.mxu0 0.0
    %281 = vmatprep.subr.mxu0 0.0
    %282 = vmatpush1.xpose.msra.mxu0 0.0
    %283 = vmatprep.subr.mxu0 0.0
    %284 = vmatpush1.xpose.msra.mxu0 0.0
    %285 = vmatprep.subr.mxu0 0.0
    %286 = vmatpush1.xpose.msra.mxu0 0.0
    %287 = vmatprep.subr.mxu0 0.0
    %288 = vmatpush1.xpose.msra.mxu0 0.0
    %289 = vmatprep.mubr.f32.mxu0 0.0
    %290 = vmatmul.mubr.f32.gmra.mrb[0].mxu0 %v221
    %v291 = vpop.f32.mrb[0].mxu0
    %v292 = vadd.f32 0.0, %v291
    %v293 = vpop.f32.mrb[0].mxu0
    %294 = vdwg.mxu0
    %v295 = vmul.f32 %v215, 0.35355338
    %v296 = vmul.f32 %v292, 0.35355338
    %v297 = vsel %vm143, %v295, -inf
    %298 = vmax.xlane.f32.xlu0 %v297
    %v299 = vpop.xlane.xlu0 %298
    %v300 = vsel %vm143, %v296, -inf
    %301 = vmax.xlane.f32.xlu0 %v300
    %v302 = vpop.xlane.xlu0 %301
    %v303 = vsub.f32 %v295, %v299
    %v304 = vsub.f32 %v296, %v302
    %v305 = vmul.f32 %v303, 1.442695
    %v306 = vpow.pop %v305
    %v307 = vmul.f32 %v304, 1.442695
    %v308 = vpow.pop %v307
    %v309 = vsel %vm143, %v306, 0.0
    %310 = vadd.xlane.f32.xlu0 %v309
    %v311 = vpop.xlane.xlu0 %310
    %v312 = vsel %vm143, %v308, 0.0
    %313 = vadd.xlane.f32.xlu0 %v312
    %v314 = vpop.xlane.xlu0 %313
    %v315 = vrcp.pop %v311
    %v316 = vrcp.pop %v314
    %v317 = vmul.f32 %v306, %v315
    %v318 = vmul.f32 %v308, %v316
    %319 = vrot.lane.b32.xlu0 %v132, 64
    %v320 = vpop.permute.xlu0 %319
    %v323 = vsel %vm143, %v317, 0
    %325 = vmatprep.subr.mxu0 0.0
    %326 = vmatpush1.msra.mxu0 %v320
    %327 = vmatprep.subr.mxu0 0.0
    %328 = vmatpush1.msra.mxu0 0.0
    %329 = vmatprep.subr.mxu0 0.0
    %330 = vmatpush1.msra.mxu0 0.0
    %331 = vmatprep.subr.mxu0 0.0
    %332 = vmatpush1.msra.mxu0 0.0
    %333 = vmatprep.subr.mxu0 0.0
    %334 = vmatpush1.msra.mxu0 0.0
    %335 = vmatprep.subr.mxu0 0.0
    %336 = vmatpush1.msra.mxu0 0.0
    %337 = vmatprep.subr.mxu0 0.0
    %338 = vmatpush1.msra.mxu0 0.0
    %339 = vmatprep.subr.mxu0 0.0
    %340 = vmatpush1.msra.mxu0 0.0
    %341 = vmatprep.subr.mxu0 0.0
    %342 = vmatpush1.msra.mxu0 0.0
    %343 = vmatprep.subr.mxu0 0.0
    %344 = vmatpush1.msra.mxu0 0.0
    %345 = vmatprep.subr.mxu0 0.0
    %346 = vmatpush1.msra.mxu0 0.0
    %347 = vmatprep.subr.mxu0 0.0
    %348 = vmatpush1.msra.mxu0 0.0
    %349 = vmatprep.subr.mxu0 0.0
    %350 = vmatpush1.msra.mxu0 0.0
    %351 = vmatprep.subr.mxu0 0.0
    %352 = vmatpush1.msra.mxu0 0.0
    %353 = vmatprep.subr.mxu0 0.0
    %354 = vmatpush1.msra.mxu0 0.0
    %355 = vmatprep.subr.mxu0 0.0
    %356 = vmatpush1.msra.mxu0 0.0
    %357 = vmatprep.subr.mxu0 0.0
    %358 = vmatpush1.msra.mxu0 0.0
    %359 = vmatprep.subr.mxu0 0.0
    %360 = vmatpush1.msra.mxu0 0.0
    %361 = vmatprep.subr.mxu0 0.0
    %362 = vmatpush1.msra.mxu0 0.0
    %363 = vmatprep.subr.mxu0 0.0
    %364 = vmatpush1.msra.mxu0 0.0
    %365 = vmatprep.subr.mxu0 0.0
    %366 = vmatpush1.msra.mxu0 0.0
    %367 = vmatprep.subr.mxu0 0.0
    %368 = vmatpush1.msra.mxu0 0.0
    %369 = vmatprep.subr.mxu0 0.0
    %370 = vmatpush1.msra.mxu0 0.0
    %371 = vmatprep.subr.mxu0 0.0
    %372 = vmatpush1.msra.mxu0 0.0
    %373 = vmatprep.subr.mxu0 0.0
    %374 = vmatpush1.msra.mxu0 0.0
    %375 = vmatprep.subr.mxu0 0.0
    %376 = vmatpush1.msra.mxu0 0.0
    %377 = vmatprep.subr.mxu0 0.0
    %378 = vmatpush1.msra.mxu0 0.0
    %379 = vmatprep.subr.mxu0 0.0
    %380 = vmatpush1.msra.mxu0 0.0
    %381 = vmatprep.subr.mxu0 0.0
    %382 = vmatpush1.msra.mxu0 0.0
    %383 = vmatprep.subr.mxu0 0.0
    %384 = vmatpush1.msra.mxu0 0.0
    %385 = vmatprep.subr.mxu0 0.0
    %386 = vmatpush1.msra.mxu0 0.0
    %387 = vmatprep.subr.mxu0 0.0
    %388 = vmatpush1.msra.mxu0 0.0
    %389 = vmatprep.mubr.f32.mxu0 0.0
    %390 = vmatmul.mubr.f32.gmra.mrb[0].mxu0 %v323
    %v391 = vpop.f32.mrb[0].mxu0
    %v392 = vadd.f32 0.0, %v391
    %v393 = vpop.f32.mrb[0].mxu0
    %394 = vdwg.mxu0
    %395 = vrot.lane.b32.xlu0 %v137, 64
    %v396 = vpop.permute.xlu0 %395
    %v399 = vsel %vm143, %v318, 0
    %401 = vmatprep.subr.mxu0 0.0
    %402 = vmatpush1.msra.mxu0 %v396
    %403 = vmatprep.subr.mxu0 0.0
    %404 = vmatpush1.msra.mxu0 0.0
    %405 = vmatprep.subr.mxu0 0.0
    %406 = vmatpush1.msra.mxu0 0.0
    %407 = vmatprep.subr.mxu0 0.0
    %408 = vmatpush1.msra.mxu0 0.0
    %409 = vmatprep.subr.mxu0 0.0
    %410 = vmatpush1.msra.mxu0 0.0
    %411 = vmatprep.subr.mxu0 0.0
    %412 = vmatpush1.msra.mxu0 0.0
    %413 = vmatprep.subr.mxu0 0.0
    %414 = vmatpush1.msra.mxu0 0.0
    %415 = vmatprep.subr.mxu0 0.0
    %416 = vmatpush1.msra.mxu0 0.0
    %417 = vmatprep.subr.mxu0 0.0
    %418 = vmatpush1.msra.mxu0 0.0
    %419 = vmatprep.subr.mxu0 0.0
    %420 = vmatpush1.msra.mxu0 0.0
    %421 = vmatprep.subr.mxu0 0.0
    %422 = vmatpush1.msra.mxu0 0.0
    %423 = vmatprep.subr.mxu0 0.0
    %424 = vmatpush1.msra.mxu0 0.0
    %425 = vmatprep.subr.mxu0 0.0
    %426 = vmatpush1.msra.mxu0 0.0
    %427 = vmatprep.subr.mxu0 0.0
    %428 = vmatpush1.msra.mxu0 0.0
    %429 = vmatprep.subr.mxu0 0.0
    %430 = vmatpush1.msra.mxu0 0.0
    %431 = vmatprep.subr.mxu0 0.0
    %432 = vmatpush1.msra.mxu0 0.0
    %433 = vmatprep.subr.mxu0 0.0
    %434 = vmatpush1.msra.mxu0 0.0
    %435 = vmatprep.subr.mxu0 0.0
    %436 = vmatpush1.msra.mxu0 0.0
    %437 = vmatprep.subr.mxu0 0.0
    %438 = vmatpush1.msra.mxu0 0.0
    %439 = vmatprep.subr.mxu0 0.0
    %440 = vmatpush1.msra.mxu0 0.0
    %441 = vmatprep.subr.mxu0 0.0
    %442 = vmatpush1.msra.mxu0 0.0
    %443 = vmatprep.subr.mxu0 0.0
    %444 = vmatpush1.msra.mxu0 0.0
    %445 = vmatprep.subr.mxu0 0.0
    %446 = vmatpush1.msra.mxu0 0.0
    %447 = vmatprep.subr.mxu0 0.0
    %448 = vmatpush1.msra.mxu0 0.0
    %449 = vmatprep.subr.mxu0 0.0
    %450 = vmatpush1.msra.mxu0 0.0
    %451 = vmatprep.subr.mxu0 0.0
    %452 = vmatpush1.msra.mxu0 0.0
    %453 = vmatprep.subr.mxu0 0.0
    %454 = vmatpush1.msra.mxu0 0.0
    %455 = vmatprep.subr.mxu0 0.0
    %456 = vmatpush1.msra.mxu0 0.0
    %457 = vmatprep.subr.mxu0 0.0
    %458 = vmatpush1.msra.mxu0 0.0
    %459 = vmatprep.subr.mxu0 0.0
    %460 = vmatpush1.msra.mxu0 0.0
    %461 = vmatprep.subr.mxu0 0.0
    %462 = vmatpush1.msra.mxu0 0.0
    %463 = vmatprep.subr.mxu0 0.0
    %464 = vmatpush1.msra.mxu0 0.0
    %465 = vmatprep.mubr.f32.mxu0 0.0
    %466 = vmatmul.mubr.f32.gmra.mrb[0].mxu0 %v399
    %v467 = vpop.f32.mrb[0].mxu0
    %v468 = vadd.f32 0.0, %v467
    %v469 = vpop.f32.mrb[0].mxu0
    %470 = vdwg.mxu0
    %471 = vrot.lane.b32.xlu0 %v132, 120
    %v472 = vpop.permute.xlu0 %471
    %473 = vrot.lane.b32.xlu0 %v132, 88
    %v474 = vpop.permute.xlu0 %473
    %v475 = vsel %vm143, %v472, 0
    %v477 = vsel %vm143, %v474, 0
    %479 = vmatprep.subr.mxu0 0.0
    %480 = vmatpush1.xpose.msra.mxu0 %v477
    %481 = vmatprep.subr.mxu0 0.0
    %482 = vmatpush1.xpose.msra.mxu0 0.0
    %483 = vmatprep.subr.mxu0 0.0
    %484 = vmatpush1.xpose.msra.mxu0 0.0
    %485 = vmatprep.subr.mxu0 0.0
    %486 = vmatpush1.xpose.msra.mxu0 0.0
    %487 = vmatprep.subr.mxu0 0.0
    %488 = vmatpush1.xpose.msra.mxu0 0.0
    %489 = vmatprep.subr.mxu0 0.0
    %490 = vmatpush1.xpose.msra.mxu0 0.0
    %491 = vmatprep.subr.mxu0 0.0
    %492 = vmatpush1.xpose.msra.mxu0 0.0
    %493 = vmatprep.subr.mxu0 0.0
    %494 = vmatpush1.xpose.msra.mxu0 0.0
    %495 = vmatprep.subr.mxu0 0.0
    %496 = vmatpush1.xpose.msra.mxu0 0.0
    %497 = vmatprep.subr.mxu0 0.0
    %498 = vmatpush1.xpose.msra.mxu0 0.0
    %499 = vmatprep.subr.mxu0 0.0
    %500 = vmatpush1.xpose.msra.mxu0 0.0
    %501 = vmatprep.subr.mxu0 0.0
    %502 = vmatpush1.xpose.msra.mxu0 0.0
    %503 = vmatprep.subr.mxu0 0.0
    %504 = vmatpush1.xpose.msra.mxu0 0.0
    %505 = vmatprep.subr.mxu0 0.0
    %506 = vmatpush1.xpose.msra.mxu0 0.0
    %507 = vmatprep.subr.mxu0 0.0
    %508 = vmatpush1.xpose.msra.mxu0 0.0
    %509 = vmatprep.subr.mxu0 0.0
    %510 = vmatpush1.xpose.msra.mxu0 0.0
    %511 = vmatprep.subr.mxu0 0.0
    %512 = vmatpush1.xpose.msra.mxu0 0.0
    %513 = vmatprep.subr.mxu0 0.0
    %514 = vmatpush1.xpose.msra.mxu0 0.0
    %515 = vmatprep.subr.mxu0 0.0
    %516 = vmatpush1.xpose.msra.mxu0 0.0
    %517 = vmatprep.subr.mxu0 0.0
    %518 = vmatpush1.xpose.msra.mxu0 0.0
    %519 = vmatprep.subr.mxu0 0.0
    %520 = vmatpush1.xpose.msra.mxu0 0.0
    %521 = vmatprep.subr.mxu0 0.0
    %522 = vmatpush1.xpose.msra.mxu0 0.0
    %523 = vmatprep.subr.mxu0 0.0
    %524 = vmatpush1.xpose.msra.mxu0 0.0
    %525 = vmatprep.subr.mxu0 0.0
    %526 = vmatpush1.xpose.msra.mxu0 0.0
    %527 = vmatprep.subr.mxu0 0.0
    %528 = vmatpush1.xpose.msra.mxu0 0.0
    %529 = vmatprep.subr.mxu0 0.0
    %530 = vmatpush1.xpose.msra.mxu0 0.0
    %531 = vmatprep.subr.mxu0 0.0
    %532 = vmatpush1.xpose.msra.mxu0 0.0
    %533 = vmatprep.subr.mxu0 0.0
    %534 = vmatpush1.xpose.msra.mxu0 0.0
    %535 = vmatprep.subr.mxu0 0.0
    %536 = vmatpush1.xpose.msra.mxu0 0.0
    %537 = vmatprep.subr.mxu0 0.0
    %538 = vmatpush1.xpose.msra.mxu0 0.0
    %539 = vmatprep.subr.mxu0 0.0
    %540 = vmatpush1.xpose.msra.mxu0 0.0
    %541 = vmatprep.subr.mxu0 0.0
    %542 = vmatpush1.xpose.msra.mxu0 0.0
    %543 = vmatprep.mubr.f32.mxu0 0.0
    %544 = vmatmul.mubr.f32.gmra.mrb[0].mxu0 %v475
    %v545 = vpop.f32.mrb[0].mxu0
    %v546 = vadd.f32 0.0, %v545
    %v547 = vpop.f32.mrb[0].mxu0
    %548 = vdwg.mxu0
    %549 = vrot.lane.b32.xlu0 %v137, 120
    %v550 = vpop.permute.xlu0 %549
    %551 = vrot.lane.b32.xlu0 %v137, 88
    %v552 = vpop.permute.xlu0 %551
    %v553 = vsel %vm143, %v550, 0
    %v555 = vsel %vm143, %v552, 0
    %557 = vmatprep.subr.mxu0 0.0
    %558 = vmatpush1.xpose.msra.mxu0 %v555
    %559 = vmatprep.subr.mxu0 0.0
    %560 = vmatpush1.xpose.msra.mxu0 0.0
    %561 = vmatprep.subr.mxu0 0.0
    %562 = vmatpush1.xpose.msra.mxu0 0.0
    %563 = vmatprep.subr.mxu0 0.0
    %564 = vmatpush1.xpose.msra.mxu0 0.0
    %565 = vmatprep.subr.mxu0 0.0
    %566 = vmatpush1.xpose.msra.mxu0 0.0
    %567 = vmatprep.subr.mxu0 0.0
    %568 = vmatpush1.xpose.msra.mxu0 0.0
    %569 = vmatprep.subr.mxu0 0.0
    %570 = vmatpush1.xpose.msra.mxu0 0.0
    %571 = vmatprep.subr.mxu0 0.0
    %572 = vmatpush1.xpose.msra.mxu0 0.0
    %573 = vmatprep.subr.mxu0 0.0
    %574 = vmatpush1.xpose.msra.mxu0 0.0
    %575 = vmatprep.subr.mxu0 0.0
    %576 = vmatpush1.xpose.msra.mxu0 0.0
    %577 = vmatprep.subr.mxu0 0.0
    %578 = vmatpush1.xpose.msra.mxu0 0.0
    %579 = vmatprep.subr.mxu0 0.0
    %580 = vmatpush1.xpose.msra.mxu0 0.0
    %581 = vmatprep.subr.mxu0 0.0
    %582 = vmatpush1.xpose.msra.mxu0 0.0
    %583 = vmatprep.subr.mxu0 0.0
    %584 = vmatpush1.xpose.msra.mxu0 0.0
    %585 = vmatprep.subr.mxu0 0.0
    %586 = vmatpush1.xpose.msra.mxu0 0.0
    %587 = vmatprep.subr.mxu0 0.0
    %588 = vmatpush1.xpose.msra.mxu0 0.0
    %589 = vmatprep.subr.mxu0 0.0
    %590 = vmatpush1.xpose.msra.mxu0 0.0
    %591 = vmatprep.subr.mxu0 0.0
    %592 = vmatpush1.xpose.msra.mxu0 0.0
    %593 = vmatprep.subr.mxu0 0.0
    %594 = vmatpush1.xpose.msra.mxu0 0.0
    %595 = vmatprep.subr.mxu0 0.0
    %596 = vmatpush1.xpose.msra.mxu0 0.0
    %597 = vmatprep.subr.mxu0 0.0
    %598 = vmatpush1.xpose.msra.mxu0 0.0
    %599 = vmatprep.subr.mxu0 0.0
    %600 = vmatpush1.xpose.msra.mxu0 0.0
    %601 = vmatprep.subr.mxu0 0.0
    %602 = vmatpush1.xpose.msra.mxu0 0.0
    %603 = vmatprep.subr.mxu0 0.0
    %604 = vmatpush1.xpose.msra.mxu0 0.0
    %605 = vmatprep.subr.mxu0 0.0
    %606 = vmatpush1.xpose.msra.mxu0 0.0
    %607 = vmatprep.subr.mxu0 0.0
    %608 = vmatpush1.xpose.msra.mxu0 0.0
    %609 = vmatprep.subr.mxu0 0.0
    %610 = vmatpush1.xpose.msra.mxu0 0.0
    %611 = vmatprep.subr.mxu0 0.0
    %612 = vmatpush1.xpose.msra.mxu0 0.0
    %613 = vmatprep.subr.mxu0 0.0
    %614 = vmatpush1.xpose.msra.mxu0 0.0
    %615 = vmatprep.subr.mxu0 0.0
    %616 = vmatpush1.xpose.msra.mxu0 0.0
    %617 = vmatprep.subr.mxu0 0.0
    %618 = vmatpush1.xpose.msra.mxu0 0.0
    %619 = vmatprep.subr.mxu0 0.0
    %620 = vmatpush1.xpose.msra.mxu0 0.0
    %621 = vmatprep.mubr.f32.mxu0 0.0
    %622 = vmatmul.mubr.f32.gmra.mrb[0].mxu0 %v553
    %v623 = vpop.f32.mrb[0].mxu0
    %v624 = vadd.f32 0.0, %v623
    %v625 = vpop.f32.mrb[0].mxu0
    %626 = vdwg.mxu0
    %v627 = vmul.f32 %v546, 0.35355338
    %v628 = vmul.f32 %v624, 0.35355338
    %v629 = vsel %vm143, %v627, -inf
    %630 = vmax.xlane.f32.xlu0 %v629
    %v631 = vpop.xlane.xlu0 %630
    %v632 = vsel %vm143, %v628, -inf
    %633 = vmax.xlane.f32.xlu0 %v632
    %v634 = vpop.xlane.xlu0 %633
    %v635 = vsub.f32 %v627, %v631
    %v636 = vsub.f32 %v628, %v634
    %v637 = vmul.f32 %v635, 1.442695
    %v638 = vpow.pop %v637
    %v639 = vmul.f32 %v636, 1.442695
    %v640 = vpow.pop %v639
    %v641 = vsel %vm143, %v638, 0.0
    %642 = vadd.xlane.f32.xlu0 %v641
    %v643 = vpop.xlane.xlu0 %642
    %v644 = vsel %vm143, %v640, 0.0
    %645 = vadd.xlane.f32.xlu0 %v644
    %v646 = vpop.xlane.xlu0 %645
    %v647 = vrcp.pop %v643
    %v648 = vrcp.pop %v646
    %v649 = vmul.f32 %v638, %v647
    %v650 = vmul.f32 %v640, %v648
    %651 = vrot.lane.b32.xlu0 %v132, 56
    %v652 = vpop.permute.xlu0 %651
    %v655 = vsel %vm143, %v649, 0
    %657 = vmatprep.subr.mxu0 0.0
    %658 = vmatpush1.msra.mxu0 %v652
    %659 = vmatprep.subr.mxu0 0.0
    %660 = vmatpush1.msra.mxu0 0.0
    %661 = vmatprep.subr.mxu0 0.0
    %662 = vmatpush1.msra.mxu0 0.0
    %663 = vmatprep.subr.mxu0 0.0
    %664 = vmatpush1.msra.mxu0 0.0
    %665 = vmatprep.subr.mxu0 0.0
    %666 = vmatpush1.msra.mxu0 0.0
    %667 = vmatprep.subr.mxu0 0.0
    %668 = vmatpush1.msra.mxu0 0.0
    %669 = vmatprep.subr.mxu0 0.0
    %670 = vmatpush1.msra.mxu0 0.0
    %671 = vmatprep.subr.mxu0 0.0
    %672 = vmatpush1.msra.mxu0 0.0
    %673 = vmatprep.subr.mxu0 0.0
    %674 = vmatpush1.msra.mxu0 0.0
    %675 = vmatprep.subr.mxu0 0.0
    %676 = vmatpush1.msra.mxu0 0.0
    %677 = vmatprep.subr.mxu0 0.0
    %678 = vmatpush1.msra.mxu0 0.0
    %679 = vmatprep.subr.mxu0 0.0
    %680 = vmatpush1.msra.mxu0 0.0
    %681 = vmatprep.subr.mxu0 0.0
    %682 = vmatpush1.msra.mxu0 0.0
    %683 = vmatprep.subr.mxu0 0.0
    %684 = vmatpush1.msra.mxu0 0.0
    %685 = vmatprep.subr.mxu0 0.0
    %686 = vmatpush1.msra.mxu0 0.0
    %687 = vmatprep.subr.mxu0 0.0
    %688 = vmatpush1.msra.mxu0 0.0
    %689 = vmatprep.subr.mxu0 0.0
    %690 = vmatpush1.msra.mxu0 0.0
    %691 = vmatprep.subr.mxu0 0.0
    %692 = vmatpush1.msra.mxu0 0.0
    %693 = vmatprep.subr.mxu0 0.0
    %694 = vmatpush1.msra.mxu0 0.0
    %695 = vmatprep.subr.mxu0 0.0
    %696 = vmatpush1.msra.mxu0 0.0
    %697 = vmatprep.subr.mxu0 0.0
    %698 = vmatpush1.msra.mxu0 0.0
    %699 = vmatprep.subr.mxu0 0.0
    %700 = vmatpush1.msra.mxu0 0.0
    %701 = vmatprep.subr.mxu0 0.0
    %702 = vmatpush1.msra.mxu0 0.0
    %703 = vmatprep.subr.mxu0 0.0
    %704 = vmatpush1.msra.mxu0 0.0
    %705 = vmatprep.subr.mxu0 0.0
    %706 = vmatpush1.msra.mxu0 0.0
    %707 = vmatprep.subr.mxu0 0.0
    %708 = vmatpush1.msra.mxu0 0.0
    %709 = vmatprep.subr.mxu0 0.0
    %710 = vmatpush1.msra.mxu0 0.0
    %711 = vmatprep.subr.mxu0 0.0
    %712 = vmatpush1.msra.mxu0 0.0
    %713 = vmatprep.subr.mxu0 0.0
    %714 = vmatpush1.msra.mxu0 0.0
    %715 = vmatprep.subr.mxu0 0.0
    %716 = vmatpush1.msra.mxu0 0.0
    %717 = vmatprep.subr.mxu0 0.0
    %718 = vmatpush1.msra.mxu0 0.0
    %719 = vmatprep.subr.mxu0 0.0
    %720 = vmatpush1.msra.mxu0 0.0
    %721 = vmatprep.mubr.f32.mxu0 0.0
    %722 = vmatmul.mubr.f32.gmra.mrb[0].mxu0 %v655
    %v723 = vpop.f32.mrb[0].mxu0
    %v724 = vadd.f32 0.0, %v723
    %v725 = vpop.f32.mrb[0].mxu0
    %726 = vdwg.mxu0
    %727 = vrot.lane.b32.xlu0 %v137, 56
    %v728 = vpop.permute.xlu0 %727
    %v731 = vsel %vm143, %v650, 0
    %733 = vmatprep.subr.mxu0 0.0
    %734 = vmatpush1.msra.mxu0 %v728
    %735 = vmatprep.subr.mxu0 0.0
    %736 = vmatpush1.msra.mxu0 0.0
    %737 = vmatprep.subr.mxu0 0.0
    %738 = vmatpush1.msra.mxu0 0.0
    %739 = vmatprep.subr.mxu0 0.0
    %740 = vmatpush1.msra.mxu0 0.0
    %741 = vmatprep.subr.mxu0 0.0
    %742 = vmatpush1.msra.mxu0 0.0
    %743 = vmatprep.subr.mxu0 0.0
    %744 = vmatpush1.msra.mxu0 0.0
    %745 = vmatprep.subr.mxu0 0.0
    %746 = vmatpush1.msra.mxu0 0.0
    %747 = vmatprep.subr.mxu0 0.0
    %748 = vmatpush1.msra.mxu0 0.0
    %749 = vmatprep.subr.mxu0 0.0
    %750 = vmatpush1.msra.mxu0 0.0
    %751 = vmatprep.subr.mxu0 0.0
    %752 = vmatpush1.msra.mxu0 0.0
    %753 = vmatprep.subr.mxu0 0.0
    %754 = vmatpush1.msra.mxu0 0.0
    %755 = vmatprep.subr.mxu0 0.0
    %756 = vmatpush1.msra.mxu0 0.0
    %757 = vmatprep.subr.mxu0 0.0
    %758 = vmatpush1.msra.mxu0 0.0
    %759 = vmatprep.subr.mxu0 0.0
    %760 = vmatpush1.msra.mxu0 0.0
    %761 = vmatprep.subr.mxu0 0.0
    %762 = vmatpush1.msra.mxu0 0.0
    %763 = vmatprep.subr.mxu0 0.0
    %764 = vmatpush1.msra.mxu0 0.0
    %765 = vmatprep.subr.mxu0 0.0
    %766 = vmatpush1.msra.mxu0 0.0
    %767 = vmatprep.subr.mxu0 0.0
    %768 = vmatpush1.msra.mxu0 0.0
    %769 = vmatprep.subr.mxu0 0.0
    %770 = vmatpush1.msra.mxu0 0.0
    %771 = vmatprep.subr.mxu0 0.0
    %772 = vmatpush1.msra.mxu0 0.0
    %773 = vmatprep.subr.mxu0 0.0
    %774 = vmatpush1.msra.mxu0 0.0
    %775 = vmatprep.subr.mxu0 0.0
    %776 = vmatpush1.msra.mxu0 0.0
    %777 = vmatprep.subr.mxu0 0.0
    %778 = vmatpush1.msra.mxu0 0.0
    %779 = vmatprep.subr.mxu0 0.0
    %780 = vmatpush1.msra.mxu0 0.0
    %781 = vmatprep.subr.mxu0 0.0
    %782 = vmatpush1.msra.mxu0 0.0
    %783 = vmatprep.subr.mxu0 0.0
    %784 = vmatpush1.msra.mxu0 0.0
    %785 = vmatprep.subr.mxu0 0.0
    %786 = vmatpush1.msra.mxu0 0.0
    %787 = vmatprep.subr.mxu0 0.0
    %788 = vmatpush1.msra.mxu0 0.0
    %789 = vmatprep.subr.mxu0 0.0
    %790 = vmatpush1.msra.mxu0 0.0
    %791 = vmatprep.subr.mxu0 0.0
    %792 = vmatpush1.msra.mxu0 0.0
    %793 = vmatprep.subr.mxu0 0.0
    %794 = vmatpush1.msra.mxu0 0.0
    %795 = vmatprep.subr.mxu0 0.0
    %796 = vmatpush1.msra.mxu0 0.0
    %797 = vmatprep.mubr.f32.mxu0 0.0
    %798 = vmatmul.mubr.f32.gmra.mrb[0].mxu0 %v731
    %v799 = vpop.f32.mrb[0].mxu0
    %v800 = vadd.f32 0.0, %v799
    %v801 = vpop.f32.mrb[0].mxu0
    %802 = vdwg.mxu0
    %803 = vrot.lane.b32.xlu0 %v132, 112
    %v804 = vpop.permute.xlu0 %803
    %805 = vrot.lane.b32.xlu0 %v132, 80
    %v806 = vpop.permute.xlu0 %805
    %v807 = vsel %vm143, %v804, 0
    %v809 = vsel %vm143, %v806, 0
    %811 = vmatprep.subr.mxu0 0.0
    %812 = vmatpush1.xpose.msra.mxu0 %v809
    %813 = vmatprep.subr.mxu0 0.0
    %814 = vmatpush1.xpose.msra.mxu0 0.0
    %815 = vmatprep.subr.mxu0 0.0
    %816 = vmatpush1.xpose.msra.mxu0 0.0
    %817 = vmatprep.subr.mxu0 0.0
    %818 = vmatpush1.xpose.msra.mxu0 0.0
    %819 = vmatprep.subr.mxu0 0.0
    %820 = vmatpush1.xpose.msra.mxu0 0.0
    %821 = vmatprep.subr.mxu0 0.0
    %822 = vmatpush1.xpose.msra.mxu0 0.0
    %823 = vmatprep.subr.mxu0 0.0
    %824 = vmatpush1.xpose.msra.mxu0 0.0
    %825 = vmatprep.subr.mxu0 0.0
    %826 = vmatpush1.xpose.msra.mxu0 0.0
    %827 = vmatprep.subr.mxu0 0.0
    %828 = vmatpush1.xpose.msra.mxu0 0.0
    %829 = vmatprep.subr.mxu0 0.0
    %830 = vmatpush1.xpose.msra.mxu0 0.0
    %831 = vmatprep.subr.mxu0 0.0
    %832 = vmatpush1.xpose.msra.mxu0 0.0
    %833 = vmatprep.subr.mxu0 0.0
    %834 = vmatpush1.xpose.msra.mxu0 0.0
    %835 = vmatprep.subr.mxu0 0.0
    %836 = vmatpush1.xpose.msra.mxu0 0.0
    %837 = vmatprep.subr.mxu0 0.0
    %838 = vmatpush1.xpose.msra.mxu0 0.0
    %839 = vmatprep.subr.mxu0 0.0
    %840 = vmatpush1.xpose.msra.mxu0 0.0
    %841 = vmatprep.subr.mxu0 0.0
    %842 = vmatpush1.xpose.msra.mxu0 0.0
    %843 = vmatprep.subr.mxu0 0.0
    %844 = vmatpush1.xpose.msra.mxu0 0.0
    %845 = vmatprep.subr.mxu0 0.0
    %846 = vmatpush1.xpose.msra.mxu0 0.0
    %847 = vmatprep.subr.mxu0 0.0
    %848 = vmatpush1.xpose.msra.mxu0 0.0
    %849 = vmatprep.subr.mxu0 0.0
    %850 = vmatpush1.xpose.msra.mxu0 0.0
    %851 = vmatprep.subr.mxu0 0.0
    %852 = vmatpush1.xpose.msra.mxu0 0.0
    %853 = vmatprep.subr.mxu0 0.0
    %854 = vmatpush1.xpose.msra.mxu0 0.0
    %855 = vmatprep.subr.mxu0 0.0
    %856 = vmatpush1.xpose.msra.mxu0 0.0
    %857 = vmatprep.subr.mxu0 0.0
    %858 = vmatpush1.xpose.msra.mxu0 0.0
    %859 = vmatprep.subr.mxu0 0.0
    %860 = vmatpush1.xpose.msra.mxu0 0.0
    %861 = vmatprep.subr.mxu0 0.0
    %862 = vmatpush1.xpose.msra.mxu0 0.0
    %863 = vmatprep.subr.mxu0 0.0
    %864 = vmatpush1.xpose.msra.mxu0 0.0
    %865 = vmatprep.subr.mxu0 0.0
    %866 = vmatpush1.xpose.msra.mxu0 0.0
    %867 = vmatprep.subr.mxu0 0.0
    %868 = vmatpush1.xpose.msra.mxu0 0.0
    %869 = vmatprep.subr.mxu0 0.0
    %870 = vmatpush1.xpose.msra.mxu0 0.0
    %871 = vmatprep.subr.mxu0 0.0
    %872 = vmatpush1.xpose.msra.mxu0 0.0
    %873 = vmatprep.subr.mxu0 0.0
    %874 = vmatpush1.xpose.msra.mxu0 0.0
    %875 = vmatprep.mubr.f32.mxu0 0.0
    %876 = vmatmul.mubr.f32.gmra.mrb[0].mxu0 %v807
    %v877 = vpop.f32.mrb[0].mxu0
    %v878 = vadd.f32 0.0, %v877
    %v879 = vpop.f32.mrb[0].mxu0
    %880 = vdwg.mxu0
    %881 = vrot.lane.b32.xlu0 %v137, 112
    %v882 = vpop.permute.xlu0 %881
    %883 = vrot.lane.b32.xlu0 %v137, 80
    %v884 = vpop.permute.xlu0 %883
    %v885 = vsel %vm143, %v882, 0
    %v887 = vsel %vm143, %v884, 0
    %889 = vmatprep.subr.mxu0 0.0
    %890 = vmatpush1.xpose.msra.mxu0 %v887
    %891 = vmatprep.subr.mxu0 0.0
    %892 = vmatpush1.xpose.msra.mxu0 0.0
    %893 = vmatprep.subr.mxu0 0.0
    %894 = vmatpush1.xpose.msra.mxu0 0.0
    %895 = vmatprep.subr.mxu0 0.0
    %896 = vmatpush1.xpose.msra.mxu0 0.0
    %897 = vmatprep.subr.mxu0 0.0
    %898 = vmatpush1.xpose.msra.mxu0 0.0
    %899 = vmatprep.subr.mxu0 0.0
    %900 = vmatpush1.xpose.msra.mxu0 0.0
    %901 = vmatprep.subr.mxu0 0.0
    %902 = vmatpush1.xpose.msra.mxu0 0.0
    %903 = vmatprep.subr.mxu0 0.0
    %904 = vmatpush1.xpose.msra.mxu0 0.0
    %905 = vmatprep.subr.mxu0 0.0
    %906 = vmatpush1.xpose.msra.mxu0 0.0
    %907 = vmatprep.subr.mxu0 0.0
    %908 = vmatpush1.xpose.msra.mxu0 0.0
    %909 = vmatprep.subr.mxu0 0.0
    %910 = vmatpush1.xpose.msra.mxu0 0.0
    %911 = vmatprep.subr.mxu0 0.0
    %912 = vmatpush1.xpose.msra.mxu0 0.0
    %913 = vmatprep.subr.mxu0 0.0
    %914 = vmatpush1.xpose.msra.mxu0 0.0
    %915 = vmatprep.subr.mxu0 0.0
    %916 = vmatpush1.xpose.msra.mxu0 0.0
    %917 = vmatprep.subr.mxu0 0.0
    %918 = vmatpush1.xpose.msra.mxu0 0.0
    %919 = vmatprep.subr.mxu0 0.0
    %920 = vmatpush1.xpose.msra.mxu0 0.0
    %921 = vmatprep.subr.mxu0 0.0
    %922 = vmatpush1.xpose.msra.mxu0 0.0
    %923 = vmatprep.subr.mxu0 0.0
    %924 = vmatpush1.xpose.msra.mxu0 0.0
    %925 = vmatprep.subr.mxu0 0.0
    %926 = vmatpush1.xpose.msra.mxu0 0.0
    %927 = vmatprep.subr.mxu0 0.0
    %928 = vmatpush1.xpose.msra.mxu0 0.0
    %929 = vmatprep.subr.mxu0 0.0
    %930 = vmatpush1.xpose.msra.mxu0 0.0
    %931 = vmatprep.subr.mxu0 0.0
    %932 = vmatpush1.xpose.msra.mxu0 0.0
    %933 = vmatprep.subr.mxu0 0.0
    %934 = vmatpush1.xpose.msra.mxu0 0.0
    %935 = vmatprep.subr.mxu0 0.0
    %936 = vmatpush1.xpose.msra.mxu0 0.0
    %937 = vmatprep.subr.mxu0 0.0
    %938 = vmatpush1.xpose.msra.mxu0 0.0
    %939 = vmatprep.subr.mxu0 0.0
    %940 = vmatpush1.xpose.msra.mxu0 0.0
    %941 = vmatprep.subr.mxu0 0.0
    %942 = vmatpush1.xpose.msra.mxu0 0.0
    %943 = vmatprep.subr.mxu0 0.0
    %944 = vmatpush1.xpose.msra.mxu0 0.0
    %945 = vmatprep.subr.mxu0 0.0
    %946 = vmatpush1.xpose.msra.mxu0 0.0
    %947 = vmatprep.subr.mxu0 0.0
    %948 = vmatpush1.xpose.msra.mxu0 0.0
    %949 = vmatprep.subr.mxu0 0.0
    %950 = vmatpush1.xpose.msra.mxu0 0.0
    %951 = vmatprep.subr.mxu0 0.0
    %952 = vmatpush1.xpose.msra.mxu0 0.0
    %953 = vmatprep.mubr.f32.mxu0 0.0
    %954 = vmatmul.mubr.f32.gmra.mrb[0].mxu0 %v885
    %v955 = vpop.f32.mrb[0].mxu0
    %v956 = vadd.f32 0.0, %v955
    %v957 = vpop.f32.mrb[0].mxu0
    %958 = vdwg.mxu0
    %v959 = vmul.f32 %v878, 0.35355338
    %v960 = vmul.f32 %v956, 0.35355338
    %v961 = vsel %vm143, %v959, -inf
    %962 = vmax.xlane.f32.xlu0 %v961
    %v963 = vpop.xlane.xlu0 %962
    %v964 = vsel %vm143, %v960, -inf
    %965 = vmax.xlane.f32.xlu0 %v964
    %v966 = vpop.xlane.xlu0 %965
    %v967 = vsub.f32 %v959, %v963
    %v968 = vsub.f32 %v960, %v966
    %v969 = vmul.f32 %v967, 1.442695
    %v970 = vpow.pop %v969
    %v971 = vmul.f32 %v968, 1.442695
    %v972 = vpow.pop %v971
    %v973 = vsel %vm143, %v970, 0.0
    %974 = vadd.xlane.f32.xlu0 %v973
    %v975 = vpop.xlane.xlu0 %974
    %v976 = vsel %vm143, %v972, 0.0
    %977 = vadd.xlane.f32.xlu0 %v976
    %v978 = vpop.xlane.xlu0 %977
    %v979 = vrcp.pop %v975
    %v980 = vrcp.pop %v978
    %v981 = vmul.f32 %v970, %v979
    %v982 = vmul.f32 %v972, %v980
    %983 = vrot.lane.b32.xlu0 %v132, 48
    %v984 = vpop.permute.xlu0 %983
    %v987 = vsel %vm143, %v981, 0
    %989 = vmatprep.subr.mxu0 0.0
    %990 = vmatpush1.msra.mxu0 %v984
    %991 = vmatprep.subr.mxu0 0.0
    %992 = vmatpush1.msra.mxu0 0.0
    %993 = vmatprep.subr.mxu0 0.0
    %994 = vmatpush1.msra.mxu0 0.0
    %995 = vmatprep.subr.mxu0 0.0
    %996 = vmatpush1.msra.mxu0 0.0
    %997 = vmatprep.subr.mxu0 0.0
    %998 = vmatpush1.msra.mxu0 0.0
    %999 = vmatprep.subr.mxu0 0.0
    %1000 = vmatpush1.msra.mxu0 0.0
    %1001 = vmatprep.subr.mxu0 0.0
    %1002 = vmatpush1.msra.mxu0 0.0
    %1003 = vmatprep.subr.mxu0 0.0
    %1004 = vmatpush1.msra.mxu0 0.0
    %1005 = vmatprep.subr.mxu0 0.0
    %1006 = vmatpush1.msra.mxu0 0.0
    %1007 = vmatprep.subr.mxu0 0.0
    %1008 = vmatpush1.msra.mxu0 0.0
    %1009 = vmatprep.subr.mxu0 0.0
    %1010 = vmatpush1.msra.mxu0 0.0
    %1011 = vmatprep.subr.mxu0 0.0
    %1012 = vmatpush1.msra.mxu0 0.0
    %1013 = vmatprep.subr.mxu0 0.0
    %1014 = vmatpush1.msra.mxu0 0.0
    %1015 = vmatprep.subr.mxu0 0.0
    %1016 = vmatpush1.msra.mxu0 0.0
    %1017 = vmatprep.subr.mxu0 0.0
    %1018 = vmatpush1.msra.mxu0 0.0
    %1019 = vmatprep.subr.mxu0 0.0
    %1020 = vmatpush1.msra.mxu0 0.0
    %1021 = vmatprep.subr.mxu0 0.0
    %1022 = vmatpush1.msra.mxu0 0.0
    %1023 = vmatprep.subr.mxu0 0.0
    %1024 = vmatpush1.msra.mxu0 0.0
    %1025 = vmatprep.subr.mxu0 0.0
    %1026 = vmatpush1.msra.mxu0 0.0
    %1027 = vmatprep.subr.mxu0 0.0
    %1028 = vmatpush1.msra.mxu0 0.0
    %1029 = vmatprep.subr.mxu0 0.0
    %1030 = vmatpush1.msra.mxu0 0.0
    %1031 = vmatprep.subr.mxu0 0.0
    %1032 = vmatpush1.msra.mxu0 0.0
    %1033 = vmatprep.subr.mxu0 0.0
    %1034 = vmatpush1.msra.mxu0 0.0
    %1035 = vmatprep.subr.mxu0 0.0
    %1036 = vmatpush1.msra.mxu0 0.0
    %1037 = vmatprep.subr.mxu0 0.0
    %1038 = vmatpush1.msra.mxu0 0.0
    %1039 = vmatprep.subr.mxu0 0.0
    %1040 = vmatpush1.msra.mxu0 0.0
    %1041 = vmatprep.subr.mxu0 0.0
    %1042 = vmatpush1.msra.mxu0 0.0
    %1043 = vmatprep.subr.mxu0 0.0
    %1044 = vmatpush1.msra.mxu0 0.0
    %1045 = vmatprep.subr.mxu0 0.0
    %1046 = vmatpush1.msra.mxu0 0.0
    %1047 = vmatprep.subr.mxu0 0.0
    %1048 = vmatpush1.msra.mxu0 0.0
    %1049 = vmatprep.subr.mxu0 0.0
    %1050 = vmatpush1.msra.mxu0 0.0
    %1051 = vmatprep.subr.mxu0 0.0
    %1052 = vmatpush1.msra.mxu0 0.0
    %1053 = vmatprep.mubr.f32.mxu0 0.0
    %1054 = vmatmul.mubr.f32.gmra.mrb[0].mxu0 %v987
    %v1055 = vpop.f32.mrb[0].mxu0
    %v1056 = vadd.f32 0.0, %v1055
    %v1057 = vpop.f32.mrb[0].mxu0
    %1058 = vdwg.mxu0
    %1059 = vrot.lane.b32.xlu0 %v137, 48
    %v1060 = vpop.permute.xlu0 %1059
    %v1063 = vsel %vm143, %v982, 0
    %1065 = vmatprep.subr.mxu0 0.0
    %1066 = vmatpush1.msra.mxu0 %v1060
    %1067 = vmatprep.subr.mxu0 0.0
    %1068 = vmatpush1.msra.mxu0 0.0
    %1069 = vmatprep.subr.mxu0 0.0
    %1070 = vmatpush1.msra.mxu0 0.0
    %1071 = vmatprep.subr.mxu0 0.0
    %1072 = vmatpush1.msra.mxu0 0.0
    %1073 = vmatprep.subr.mxu0 0.0
    %1074 = vmatpush1.msra.mxu0 0.0
    %1075 = vmatprep.subr.mxu0 0.0
    %1076 = vmatpush1.msra.mxu0 0.0
    %1077 = vmatprep.subr.mxu0 0.0
    %1078 = vmatpush1.msra.mxu0 0.0
    %1079 = vmatprep.subr.mxu0 0.0
    %1080 = vmatpush1.msra.mxu0 0.0
    %1081 = vmatprep.subr.mxu0 0.0
    %1082 = vmatpush1.msra.mxu0 0.0
    %1083 = vmatprep.subr.mxu0 0.0
    %1084 = vmatpush1.msra.mxu0 0.0
    %1085 = vmatprep.subr.mxu0 0.0
    %1086 = vmatpush1.msra.mxu0 0.0
    %1087 = vmatprep.subr.mxu0 0.0
    %1088 = vmatpush1.msra.mxu0 0.0
    %1089 = vmatprep.subr.mxu0 0.0
    %1090 = vmatpush1.msra.mxu0 0.0
    %1091 = vmatprep.subr.mxu0 0.0
    %1092 = vmatpush1.msra.mxu0 0.0
    %1093 = vmatprep.subr.mxu0 0.0
    %1094 = vmatpush1.msra.mxu0 0.0
    %1095 = vmatprep.subr.mxu0 0.0
    %1096 = vmatpush1.msra.mxu0 0.0
    %1097 = vmatprep.subr.mxu0 0.0
    %1098 = vmatpush1.msra.mxu0 0.0
    %1099 = vmatprep.subr.mxu0 0.0
    %1100 = vmatpush1.msra.mxu0 0.0
    %1101 = vmatprep.subr.mxu0 0.0
    %1102 = vmatpush1.msra.mxu0 0.0
    %1103 = vmatprep.subr.mxu0 0.0
    %1104 = vmatpush1.msra.mxu0 0.0
    %1105 = vmatprep.subr.mxu0 0.0
    %1106 = vmatpush1.msra.mxu0 0.0
    %1107 = vmatprep.subr.mxu0 0.0
    %1108 = vmatpush1.msra.mxu0 0.0
    %1109 = vmatprep.subr.mxu0 0.0
    %1110 = vmatpush1.msra.mxu0 0.0
    %1111 = vmatprep.subr.mxu0 0.0
    %1112 = vmatpush1.msra.mxu0 0.0
    %1113 = vmatprep.subr.mxu0 0.0
    %1114 = vmatpush1.msra.mxu0 0.0
    %1115 = vmatprep.subr.mxu0 0.0
    %1116 = vmatpush1.msra.mxu0 0.0
    %1117 = vmatprep.subr.mxu0 0.0
    %1118 = vmatpush1.msra.mxu0 0.0
    %1119 = vmatprep.subr.mxu0 0.0
    %1120 = vmatpush1.msra.mxu0 0.0
    %1121 = vmatprep.subr.mxu0 0.0
    %1122 = vmatpush1.msra.mxu0 0.0
    %1123 = vmatprep.subr.mxu0 0.0
    %1124 = vmatpush1.msra.mxu0 0.0
    %1125 = vmatprep.subr.mxu0 0.0
    %1126 = vmatpush1.msra.mxu0 0.0
    %1127 = vmatprep.subr.mxu0 0.0
    %1128 = vmatpush1.msra.mxu0 0.0
    %1129 = vmatprep.mubr.f32.mxu0 0.0
    %1130 = vmatmul.mubr.f32.gmra.mrb[0].mxu0 %v1063
    %v1131 = vpop.f32.mrb[0].mxu0
    %v1132 = vadd.f32 0.0, %v1131
    %v1133 = vpop.f32.mrb[0].mxu0
    %1134 = vdwg.mxu0
    %1135 = vrot.lane.b32.xlu0 %v132, 104
    %v1136 = vpop.permute.xlu0 %1135
    %1137 = vrot.lane.b32.xlu0 %v132, 72
    %v1138 = vpop.permute.xlu0 %1137
    %v1139 = vsel %vm143, %v1136, 0
    %v1141 = vsel %vm143, %v1138, 0
    %1143 = vmatprep.subr.mxu0 0.0
    %1144 = vmatpush1.xpose.msra.mxu0 %v1141
    %1145 = vmatprep.subr.mxu0 0.0
    %1146 = vmatpush1.xpose.msra.mxu0 0.0
    %1147 = vmatprep.subr.mxu0 0.0
    %1148 = vmatpush1.xpose.msra.mxu0 0.0
    %1149 = vmatprep.subr.mxu0 0.0
    %1150 = vmatpush1.xpose.msra.mxu0 0.0
    %1151 = vmatprep.subr.mxu0 0.0
    %1152 = vmatpush1.xpose.msra.mxu0 0.0
    %1153 = vmatprep.subr.mxu0 0.0
    %1154 = vmatpush1.xpose.msra.mxu0 0.0
    %1155 = vmatprep.subr.mxu0 0.0
    %1156 = vmatpush1.xpose.msra.mxu0 0.0
    %1157 = vmatprep.subr.mxu0 0.0
    %1158 = vmatpush1.xpose.msra.mxu0 0.0
    %1159 = vmatprep.subr.mxu0 0.0
    %1160 = vmatpush1.xpose.msra.mxu0 0.0
    %1161 = vmatprep.subr.mxu0 0.0
    %1162 = vmatpush1.xpose.msra.mxu0 0.0
    %1163 = vmatprep.subr.mxu0 0.0
    %1164 = vmatpush1.xpose.msra.mxu0 0.0
    %1165 = vmatprep.subr.mxu0 0.0
    %1166 = vmatpush1.xpose.msra.mxu0 0.0
    %1167 = vmatprep.subr.mxu0 0.0
    %1168 = vmatpush1.xpose.msra.mxu0 0.0
    %1169 = vmatprep.subr.mxu0 0.0
    %1170 = vmatpush1.xpose.msra.mxu0 0.0
    %1171 = vmatprep.subr.mxu0 0.0
    %1172 = vmatpush1.xpose.msra.mxu0 0.0
    %1173 = vmatprep.subr.mxu0 0.0
    %1174 = vmatpush1.xpose.msra.mxu0 0.0
    %1175 = vmatprep.subr.mxu0 0.0
    %1176 = vmatpush1.xpose.msra.mxu0 0.0
    %1177 = vmatprep.subr.mxu0 0.0
    %1178 = vmatpush1.xpose.msra.mxu0 0.0
    %1179 = vmatprep.subr.mxu0 0.0
    %1180 = vmatpush1.xpose.msra.mxu0 0.0
    %1181 = vmatprep.subr.mxu0 0.0
    %1182 = vmatpush1.xpose.msra.mxu0 0.0
    %1183 = vmatprep.subr.mxu0 0.0
    %1184 = vmatpush1.xpose.msra.mxu0 0.0
    %1185 = vmatprep.subr.mxu0 0.0
    %1186 = vmatpush1.xpose.msra.mxu0 0.0
    %1187 = vmatprep.subr.mxu0 0.0
    %1188 = vmatpush1.xpose.msra.mxu0 0.0
    %1189 = vmatprep.subr.mxu0 0.0
    %1190 = vmatpush1.xpose.msra.mxu0 0.0
    %1191 = vmatprep.subr.mxu0 0.0
    %1192 = vmatpush1.xpose.msra.mxu0 0.0
    %1193 = vmatprep.subr.mxu0 0.0
    %1194 = vmatpush1.xpose.msra.mxu0 0.0
    %1195 = vmatprep.subr.mxu0 0.0
    %1196 = vmatpush1.xpose.msra.mxu0 0.0
    %1197 = vmatprep.subr.mxu0 0.0
    %1198 = vmatpush1.xpose.msra.mxu0 0.0
    %1199 = vmatprep.subr.mxu0 0.0
    %1200 = vmatpush1.xpose.msra.mxu0 0.0
    %1201 = vmatprep.subr.mxu0 0.0
    %1202 = vmatpush1.xpose.msra.mxu0 0.0
    %1203 = vmatprep.subr.mxu0 0.0
    %1204 = vmatpush1.xpose.msra.mxu0 0.0
    %1205 = vmatprep.subr.mxu0 0.0
    %1206 = vmatpush1.xpose.msra.mxu0 0.0
    %1207 = vmatprep.mubr.f32.mxu0 0.0
    %1208 = vmatmul.mubr.f32.gmra.mrb[0].mxu0 %v1139
    %v1209 = vpop.f32.mrb[0].mxu0
    %v1210 = vadd.f32 0.0, %v1209
    %v1211 = vpop.f32.mrb[0].mxu0
    %1212 = vdwg.mxu0
    %1213 = vrot.lane.b32.xlu0 %v137, 104
    %v1214 = vpop.permute.xlu0 %1213
    %1215 = vrot.lane.b32.xlu0 %v137, 72
    %v1216 = vpop.permute.xlu0 %1215
    %v1217 = vsel %vm143, %v1214, 0
    %v1219 = vsel %vm143, %v1216, 0
    %1221 = vmatprep.subr.mxu0 0.0
    %1222 = vmatpush1.xpose.msra.mxu0 %v1219
    %1223 = vmatprep.subr.mxu0 0.0
    %1224 = vmatpush1.xpose.msra.mxu0 0.0
    %1225 = vmatprep.subr.mxu0 0.0
    %1226 = vmatpush1.xpose.msra.mxu0 0.0
    %1227 = vmatprep.subr.mxu0 0.0
    %1228 = vmatpush1.xpose.msra.mxu0 0.0
    %1229 = vmatprep.subr.mxu0 0.0
    %1230 = vmatpush1.xpose.msra.mxu0 0.0
    %1231 = vmatprep.subr.mxu0 0.0
    %1232 = vmatpush1.xpose.msra.mxu0 0.0
    %1233 = vmatprep.subr.mxu0 0.0
    %1234 = vmatpush1.xpose.msra.mxu0 0.0
    %1235 = vmatprep.subr.mxu0 0.0
    %1236 = vmatpush1.xpose.msra.mxu0 0.0
    %1237 = vmatprep.subr.mxu0 0.0
    %1238 = vmatpush1.xpose.msra.mxu0 0.0
    %1239 = vmatprep.subr.mxu0 0.0
    %1240 = vmatpush1.xpose.msra.mxu0 0.0
    %1241 = vmatprep.subr.mxu0 0.0
    %1242 = vmatpush1.xpose.msra.mxu0 0.0
    %1243 = vmatprep.subr.mxu0 0.0
    %1244 = vmatpush1.xpose.msra.mxu0 0.0
    %1245 = vmatprep.subr.mxu0 0.0
    %1246 = vmatpush1.xpose.msra.mxu0 0.0
    %1247 = vmatprep.subr.mxu0 0.0
    %1248 = vmatpush1.xpose.msra.mxu0 0.0
    %1249 = vmatprep.subr.mxu0 0.0
    %1250 = vmatpush1.xpose.msra.mxu0 0.0
    %1251 = vmatprep.subr.mxu0 0.0
    %1252 = vmatpush1.xpose.msra.mxu0 0.0
    %1253 = vmatprep.subr.mxu0 0.0
    %1254 = vmatpush1.xpose.msra.mxu0 0.0
    %1255 = vmatprep.subr.mxu0 0.0
    %1256 = vmatpush1.xpose.msra.mxu0 0.0
    %1257 = vmatprep.subr.mxu0 0.0
    %1258 = vmatpush1.xpose.msra.mxu0 0.0
    %1259 = vmatprep.subr.mxu0 0.0
    %1260 = vmatpush1.xpose.msra.mxu0 0.0
    %1261 = vmatprep.subr.mxu0 0.0
    %1262 = vmatpush1.xpose.msra.mxu0 0.0
    %1263 = vmatprep.subr.mxu0 0.0
    %1264 = vmatpush1.xpose.msra.mxu0 0.0
    %1265 = vmatprep.subr.mxu0 0.0
    %1266 = vmatpush1.xpose.msra.mxu0 0.0
    %1267 = vmatprep.subr.mxu0 0.0
    %1268 = vmatpush1.xpose.msra.mxu0 0.0
    %1269 = vmatprep.subr.mxu0 0.0
    %1270 = vmatpush1.xpose.msra.mxu0 0.0
    %1271 = vmatprep.subr.mxu0 0.0
    %1272 = vmatpush1.xpose.msra.mxu0 0.0
    %1273 = vmatprep.subr.mxu0 0.0
    %1274 = vmatpush1.xpose.msra.mxu0 0.0
    %1275 = vmatprep.subr.mxu0 0.0
    %1276 = vmatpush1.xpose.msra.mxu0 0.0
    %1277 = vmatprep.subr.mxu0 0.0
    %1278 = vmatpush1.xpose.msra.mxu0 0.0
    %1279 = vmatprep.subr.mxu0 0.0
    %1280 = vmatpush1.xpose.msra.mxu0 0.0
    %1281 = vmatprep.subr.mxu0 0.0
    %1282 = vmatpush1.xpose.msra.mxu0 0.0
    %1283 = vmatprep.subr.mxu0 0.0
    %1284 = vmatpush1.xpose.msra.mxu0 0.0
    %1285 = vmatprep.mubr.f32.mxu0 0.0
    %1286 = vmatmul.mubr.f32.gmra.mrb[0].mxu0 %v1217
    %v1287 = vpop.f32.mrb[0].mxu0
    %v1288 = vadd.f32 0.0, %v1287
    %v1289 = vpop.f32.mrb[0].mxu0
    %1290 = vdwg.mxu0
    %v1291 = vmul.f32 %v1210, 0.35355338
    %v1292 = vmul.f32 %v1288, 0.35355338
    %v1293 = vsel %vm143, %v1291, -inf
    %1294 = vmax.xlane.f32.xlu0 %v1293
    %v1295 = vpop.xlane.xlu0 %1294
    %v1296 = vsel %vm143, %v1292, -inf
    %1297 = vmax.xlane.f32.xlu0 %v1296
    %v1298 = vpop.xlane.xlu0 %1297
    %v1299 = vsub.f32 %v1291, %v1295
    %v1300 = vsub.f32 %v1292, %v1298
    %v1301 = vmul.f32 %v1299, 1.442695
    %v1302 = vpow.pop %v1301
    %v1303 = vmul.f32 %v1300, 1.442695
    %v1304 = vpow.pop %v1303
    %v1305 = vsel %vm143, %v1302, 0.0
    %1306 = vadd.xlane.f32.xlu0 %v1305
    %v1307 = vpop.xlane.xlu0 %1306
    %v1308 = vsel %vm143, %v1304, 0.0
    %1309 = vadd.xlane.f32.xlu0 %v1308
    %v1310 = vpop.xlane.xlu0 %1309
    %v1311 = vrcp.pop %v1307
    %v1312 = vrcp.pop %v1310
    %v1313 = vmul.f32 %v1302, %v1311
    %v1314 = vmul.f32 %v1304, %v1312
    %1315 = vrot.lane.b32.xlu0 %v132, 40
    %v1316 = vpop.permute.xlu0 %1315
    %v1319 = vsel %vm143, %v1313, 0
    %1321 = vmatprep.subr.mxu0 0.0
    %1322 = vmatpush1.msra.mxu0 %v1316
    %1323 = vmatprep.subr.mxu0 0.0
    %1324 = vmatpush1.msra.mxu0 0.0
    %1325 = vmatprep.subr.mxu0 0.0
    %1326 = vmatpush1.msra.mxu0 0.0
    %1327 = vmatprep.subr.mxu0 0.0
    %1328 = vmatpush1.msra.mxu0 0.0
    %1329 = vmatprep.subr.mxu0 0.0
    %1330 = vmatpush1.msra.mxu0 0.0
    %1331 = vmatprep.subr.mxu0 0.0
    %1332 = vmatpush1.msra.mxu0 0.0
    %1333 = vmatprep.subr.mxu0 0.0
    %1334 = vmatpush1.msra.mxu0 0.0
    %1335 = vmatprep.subr.mxu0 0.0
    %1336 = vmatpush1.msra.mxu0 0.0
    %1337 = vmatprep.subr.mxu0 0.0
    %1338 = vmatpush1.msra.mxu0 0.0
    %1339 = vmatprep.subr.mxu0 0.0
    %1340 = vmatpush1.msra.mxu0 0.0
    %1341 = vmatprep.subr.mxu0 0.0
    %1342 = vmatpush1.msra.mxu0 0.0
    %1343 = vmatprep.subr.mxu0 0.0
    %1344 = vmatpush1.msra.mxu0 0.0
    %1345 = vmatprep.subr.mxu0 0.0
    %1346 = vmatpush1.msra.mxu0 0.0
    %1347 = vmatprep.subr.mxu0 0.0
    %1348 = vmatpush1.msra.mxu0 0.0
    %1349 = vmatprep.subr.mxu0 0.0
    %1350 = vmatpush1.msra.mxu0 0.0
    %1351 = vmatprep.subr.mxu0 0.0
    %1352 = vmatpush1.msra.mxu0 0.0
    %1353 = vmatprep.subr.mxu0 0.0
    %1354 = vmatpush1.msra.mxu0 0.0
    %1355 = vmatprep.subr.mxu0 0.0
    %1356 = vmatpush1.msra.mxu0 0.0
    %1357 = vmatprep.subr.mxu0 0.0
    %1358 = vmatpush1.msra.mxu0 0.0
    %1359 = vmatprep.subr.mxu0 0.0
    %1360 = vmatpush1.msra.mxu0 0.0
    %1361 = vmatprep.subr.mxu0 0.0
    %1362 = vmatpush1.msra.mxu0 0.0
    %1363 = vmatprep.subr.mxu0 0.0
    %1364 = vmatpush1.msra.mxu0 0.0
    %1365 = vmatprep.subr.mxu0 0.0
    %1366 = vmatpush1.msra.mxu0 0.0
    %1367 = vmatprep.subr.mxu0 0.0
    %1368 = vmatpush1.msra.mxu0 0.0
    %1369 = vmatprep.subr.mxu0 0.0
    %1370 = vmatpush1.msra.mxu0 0.0
    %1371 = vmatprep.subr.mxu0 0.0
    %1372 = vmatpush1.msra.mxu0 0.0
    %1373 = vmatprep.subr.mxu0 0.0
    %1374 = vmatpush1.msra.mxu0 0.0
    %1375 = vmatprep.subr.mxu0 0.0
    %1376 = vmatpush1.msra.mxu0 0.0
    %1377 = vmatprep.subr.mxu0 0.0
    %1378 = vmatpush1.msra.mxu0 0.0
    %1379 = vmatprep.subr.mxu0 0.0
    %1380 = vmatpush1.msra.mxu0 0.0
    %1381 = vmatprep.subr.mxu0 0.0
    %1382 = vmatpush1.msra.mxu0 0.0
    %1383 = vmatprep.subr.mxu0 0.0
    %1384 = vmatpush1.msra.mxu0 0.0
    %1385 = vmatprep.mubr.f32.mxu0 0.0
    %1386 = vmatmul.mubr.f32.gmra.mrb[0].mxu0 %v1319
    %v1387 = vpop.f32.mrb[0].mxu0
    %v1388 = vadd.f32 0.0, %v1387
    %v1389 = vpop.f32.mrb[0].mxu0
    %1390 = vdwg.mxu0
    %1391 = vrot.lane.b32.xlu0 %v137, 40
    %v1392 = vpop.permute.xlu0 %1391
    %v1395 = vsel %vm143, %v1314, 0
    %1397 = vmatprep.subr.mxu0 0.0
    %1398 = vmatpush1.msra.mxu0 %v1392
    %1399 = vmatprep.subr.mxu0 0.0
    %1400 = vmatpush1.msra.mxu0 0.0
    %1401 = vmatprep.subr.mxu0 0.0
    %1402 = vmatpush1.msra.mxu0 0.0
    %1403 = vmatprep.subr.mxu0 0.0
    %1404 = vmatpush1.msra.mxu0 0.0
    %1405 = vmatprep.subr.mxu0 0.0
    %1406 = vmatpush1.msra.mxu0 0.0
    %1407 = vmatprep.subr.mxu0 0.0
    %1408 = vmatpush1.msra.mxu0 0.0
    %1409 = vmatprep.subr.mxu0 0.0
    %1410 = vmatpush1.msra.mxu0 0.0
    %1411 = vmatprep.subr.mxu0 0.0
    %1412 = vmatpush1.msra.mxu0 0.0
    %1413 = vmatprep.subr.mxu0 0.0
    %1414 = vmatpush1.msra.mxu0 0.0
    %1415 = vmatprep.subr.mxu0 0.0
    %1416 = vmatpush1.msra.mxu0 0.0
    %1417 = vmatprep.subr.mxu0 0.0
    %1418 = vmatpush1.msra.mxu0 0.0
    %1419 = vmatprep.subr.mxu0 0.0
    %1420 = vmatpush1.msra.mxu0 0.0
    %1421 = vmatprep.subr.mxu0 0.0
    %1422 = vmatpush1.msra.mxu0 0.0
    %1423 = vmatprep.subr.mxu0 0.0
    %1424 = vmatpush1.msra.mxu0 0.0
    %1425 = vmatprep.subr.mxu0 0.0
    %1426 = vmatpush1.msra.mxu0 0.0
    %1427 = vmatprep.subr.mxu0 0.0
    %1428 = vmatpush1.msra.mxu0 0.0
    %1429 = vmatprep.subr.mxu0 0.0
    %1430 = vmatpush1.msra.mxu0 0.0
    %1431 = vmatprep.subr.mxu0 0.0
    %1432 = vmatpush1.msra.mxu0 0.0
    %1433 = vmatprep.subr.mxu0 0.0
    %1434 = vmatpush1.msra.mxu0 0.0
    %1435 = vmatprep.subr.mxu0 0.0
    %1436 = vmatpush1.msra.mxu0 0.0
    %1437 = vmatprep.subr.mxu0 0.0
    %1438 = vmatpush1.msra.mxu0 0.0
    %1439 = vmatprep.subr.mxu0 0.0
    %1440 = vmatpush1.msra.mxu0 0.0
    %1441 = vmatprep.subr.mxu0 0.0
    %1442 = vmatpush1.msra.mxu0 0.0
    %1443 = vmatprep.subr.mxu0 0.0
    %1444 = vmatpush1.msra.mxu0 0.0
    %1445 = vmatprep.subr.mxu0 0.0
    %1446 = vmatpush1.msra.mxu0 0.0
    %1447 = vmatprep.subr.mxu0 0.0
    %1448 = vmatpush1.msra.mxu0 0.0
    %1449 = vmatprep.subr.mxu0 0.0
    %1450 = vmatpush1.msra.mxu0 0.0
    %1451 = vmatprep.subr.mxu0 0.0
    %1452 = vmatpush1.msra.mxu0 0.0
    %1453 = vmatprep.subr.mxu0 0.0
    %1454 = vmatpush1.msra.mxu0 0.0
    %1455 = vmatprep.subr.mxu0 0.0
    %1456 = vmatpush1.msra.mxu0 0.0
    %1457 = vmatprep.subr.mxu0 0.0
    %1458 = vmatpush1.msra.mxu0 0.0
    %1459 = vmatprep.subr.mxu0 0.0
    %1460 = vmatpush1.msra.mxu0 0.0
    %1461 = vmatprep.mubr.f32.mxu0 0.0
    %1462 = vmatmul.mubr.f32.gmra.mrb[0].mxu0 %v1395
    %v1463 = vpop.f32.mrb[0].mxu0
    %v1464 = vadd.f32 0.0, %v1463
    %v1465 = vpop.f32.mrb[0].mxu0
    %1466 = vdwg.mxu0
    %1469 = vrot.lane.b32.xlu0 %v724, 8
    %v1470 = vpop.permute.xlu0 %1469
    %1471 = vrot.lane.b32.xlu0 %v800, 8
    %v1472 = vpop.permute.xlu0 %1471
    %1477 = vrot.lane.b32.xlu0 %v1056, 16
    %v1478 = vpop.permute.xlu0 %1477
    %1479 = vrot.lane.b32.xlu0 %v1132, 16
    %v1480 = vpop.permute.xlu0 %1479
    %1485 = vrot.lane.b32.xlu0 %v1388, 24
    %v1486 = vpop.permute.xlu0 %1485
    %1487 = vrot.lane.b32.xlu0 %v1464, 24
    %v1488 = vpop.permute.xlu0 %1487
    %v1491 = vsel %vm143, %v392, %v1470
    %v1492 = vsel %vm143, %v468, %v1472
    %vm1493 = vcmask 130048
    %v1494 = vsel %vm1493, %v1491, %v1478
    %v1495 = vsel %vm1493, %v1492, %v1480
    %vm1496 = vcmask 195584
    %v1497 = vsel %vm1496, %v1494, %v1486
    %v1498 = vsel %vm1496, %v1495, %v1488
    %vm1499 = vcmask 261120
    %1500 = vst.msk [vmem:[#allocation7] sm:$0xff] %vm1499, %v1497
    %1501 = vst.msk [vmem:[#allocation7 + $0x8] sm:$0xff] %vm1499, %v1498
    // Predicated region
    $region22: #{tpu_custom_call.1} parent=1 // pred_check
      _
    $region23: #{tpu_custom_call.1} parent=1 // pred_check_branch
      %1503 = sbr.rel (0) target = $region25
    $region24: #{tpu_custom_call.1} parent=1 // pred_region
      %s1505 = ssub.s32 256, 256
      %1506 = vsyncadd [#allocation4], %s1505
      %s1507 = sshll.u32 [#allocation7], 4
      %s1508 = int_to_ptr.vmem [resolvable:$true] %s1507
      %1513 = dma.vmem_to_hbm [thread:$0]  %s1508, 256, %s3, [#allocation4], 128, 128, 8
    $region25: #{tpu_custom_call.1} parent=1 // pred_fallthru
      _
    // Predicated region
    $region26: #{tpu_custom_call.1} parent=1 // pred_check
      _
    $region27: #{tpu_custom_call.1} parent=1 // pred_check_branch
      %1515 = sbr.rel (0) target = $region29
    $region28: #{tpu_custom_call.1} parent=1 // pred_region
      %1516 = dma.done [#allocation4], 256
    $region29: #{tpu_custom_call.1} parent=1 // pred_fallthru
      _
    %1517 = vsyncpa [#allocation3], 1
    %1518 = vsyncpa [#allocation6], 1
    %1519 = vsyncpa [#allocation4], 1

</llo_original>
